<compile_context>
chip_gen: v7x
topology: tpu7x:2x2x1
jax: 0.10.0
libtpu: 0.0.40
codegen_flags: <defaults>
</compile_context>

<pallas_src>
import functools
import math

import jax
import jax.numpy as jnp
from jax.experimental import pallas as pl
from jax.experimental.pallas import tpu as pltpu

EPS = 1e-5                      # nn.LayerNorm default eps
VMEM_LIMIT = 48 * 1024 * 1024   # safe on v5e/v6e (128 MiB) and v7x (64 MiB)


# ---------------------------------------------------------------- kernels ---

def ln_qkv_kernel(x_ref, g_ref, b_ref, w_ref, bias_ref, q_ref, k_ref, v_ref):
    """LayerNorm(x tile) fused with the QKV projection; 3 bf16 outputs."""
    x = x_ref[...]                                        # (tm, E) f32
    mu = jnp.mean(x, axis=-1, keepdims=True)
    var = jnp.mean((x - mu) ** 2, axis=-1, keepdims=True)
    xn = (x - mu) * jax.lax.rsqrt(var + EPS) * g_ref[...] + b_ref[...]
    y = jnp.dot(xn.astype(w_ref.dtype), w_ref[...],
                preferred_element_type=jnp.float32) + bias_ref[...]  # (tm, 3E)
    E = q_ref.shape[-1]
    q_ref[...] = y[:, :E].astype(q_ref.dtype)
    k_ref[...] = y[:, E:2 * E].astype(k_ref.dtype)
    v_ref[...] = y[:, 2 * E:].astype(v_ref.dtype)


def flash_attn_kernel(q_ref, k_ref, v_ref, o_ref, m_sc, l_sc, acc_sc):
    """Online-softmax attention. grid = (head, q_tile, kv_tile); kv innermost.

    Scale is pre-folded into the Q projection weights; q/k/v are bf16 and the
    softmax statistics/accumulator stay f32.
    """
    kv = pl.program_id(2)

    @pl.when(kv == 0)
    def _():
        m_sc[...] = jnp.full(m_sc.shape, -jnp.inf, m_sc.dtype)
        l_sc[...] = jnp.zeros(l_sc.shape, l_sc.dtype)
        acc_sc[...] = jnp.zeros(acc_sc.shape, acc_sc.dtype)

    q = q_ref[...]                                        # (tq, hd) bf16
    k = k_ref[...]                                        # (tk, hd) bf16
    s = jax.lax.dot_general(q, k, (((1,), (1,)), ((), ())),
                            preferred_element_type=jnp.float32)   # (tq, tk)
    m_prev = m_sc[...]
    m_new = jnp.maximum(m_prev, jnp.max(s, axis=-1, keepdims=True))
    alpha = jnp.exp(m_prev - m_new)
    p = jnp.exp(s - m_new)
    l_sc[...] = alpha * l_sc[...] + jnp.sum(p, axis=-1, keepdims=True)
    acc_sc[...] = alpha * acc_sc[...] + jnp.dot(
        p.astype(v_ref.dtype), v_ref[...], preferred_element_type=jnp.float32)
    m_sc[...] = m_new

    @pl.when(kv == pl.num_programs(2) - 1)
    def _():
        inv_l = pl.reciprocal(l_sc[...], approx=True)     # EUP slot
        o_ref[...] = (acc_sc[...] * inv_l).astype(o_ref.dtype)


def attn_out_ffn_kernel(a_ref, wo_ref, bo_ref, res_ref, g_ref, b_ref,
                        w1_ref, b1_ref, w2_ref, b2_ref, o_ref,
                        x_sc, xn_sc, acc_sc):
    """out-proj + residual + norm2 + lin1 + ReLU + lin2 + residual.

    grid = (M tiles, F tiles); F is an accumulation ("arbitrary") axis.  The
    post-attention residual and the normalized activation live in VMEM scratch
    for the whole F loop; the hidden activation never touches HBM.
    """
    f = pl.program_id(1)

    @pl.when(f == 0)
    def _():
        # attention output projection + first residual (old kernel C)
        y = jnp.dot(a_ref[...], wo_ref[...],
                    preferred_element_type=jnp.float32) + bo_ref[...]
        x = res_ref[...] + y                              # (tm, E) f32
        x_sc[...] = x
        # norm2 in f32, stored bf16 for the MXU
        mu = jnp.mean(x, axis=-1, keepdims=True)
        var = jnp.mean((x - mu) ** 2, axis=-1, keepdims=True)
        xn = (x - mu) * jax.lax.rsqrt(var + EPS) * g_ref[...] + b_ref[...]
        xn_sc[...] = xn.astype(xn_sc.dtype)
        acc_sc[...] = jnp.zeros(acc_sc.shape, acc_sc.dtype)

    h = jnp.maximum(
        jnp.dot(xn_sc[...], w1_ref[...],
                preferred_element_type=jnp.float32) + b1_ref[...], 0.0)  # (tm, tf)
    acc_sc[...] += jnp.dot(h.astype(w2_ref.dtype), w2_ref[...],
                           preferred_element_type=jnp.float32)           # (tm, E)

    @pl.when(f == pl.num_programs(1) - 1)
    def _():
        o_ref[...] = x_sc[...] + acc_sc[...] + b2_ref[...]


# ------------------------------------------------------------- wrappers -----

def _tile(dim, pref, mult=8):
    """Largest divisor of `dim` that is <= pref, preferring `mult`-aligned
    tiles.  Avoids the old silent fall-back to one giant full-dim block.
    TODO(synk): pad + mask partial tiles instead for awkward prime-ish dims."""
    pref = max(1, min(pref, dim))
    for t in range(pref, 0, -1):
        if dim % t == 0 and (t % mult == 0 or t == dim):
            return t
    for t in range(pref, 0, -1):
        if dim % t == 0:
            return t
    return dim


def ln_qkv_proj(x, gamma, beta, w, bias, *, tm):
    M, E = x.shape
    E3 = w.shape[1]
    # TODO(synk): for very large E, tile the 3E output dim on a second grid
    # axis instead of keeping the full (E, 3E) weight resident.
    return pl.pallas_call(
        ln_qkv_kernel,
        grid=(M // tm,),
        in_specs=[
            pl.BlockSpec((tm, E), lambda i: (i, 0)),
            pl.BlockSpec((1, E), lambda i: (0, 0)),
            pl.BlockSpec((1, E), lambda i: (0, 0)),
            pl.BlockSpec((E, E3), lambda i: (0, 0)),
            pl.BlockSpec((1, E3), lambda i: (0, 0)),
        ],
        out_specs=[
            pl.BlockSpec((tm, E), lambda i: (i, 0)),
            pl.BlockSpec((tm, E), lambda i: (i, 0)),
            pl.BlockSpec((tm, E), lambda i: (i, 0)),
        ],
        out_shape=[
            jax.ShapeDtypeStruct((M, E), jnp.bfloat16),
            jax.ShapeDtypeStruct((M, E), jnp.bfloat16),
            jax.ShapeDtypeStruct((M, E), jnp.bfloat16),
        ],
        compiler_params=pltpu.CompilerParams(
            dimension_semantics=("parallel",),
            vmem_limit_bytes=VMEM_LIMIT),
    )(x, gamma, beta, w, bias)


def flash_attention(q, k, v, *, tq, tk):
    BH, L, hd = q.shape
    # TODO(synk): when hd < 128, pack 2 heads per grid step for lane-dense
    # stores and a fuller MXU contraction dim.
    return pl.pallas_call(
        flash_attn_kernel,
        grid=(BH, L // tq, L // tk),
        in_specs=[
            pl.BlockSpec((None, tq, hd), lambda b, qi, ki: (b, qi, 0)),
            pl.BlockSpec((None, tk, hd), lambda b, qi, ki: (b, ki, 0)),
            pl.BlockSpec((None, tk, hd), lambda b, qi, ki: (b, ki, 0)),
        ],
        out_specs=pl.BlockSpec((None, tq, hd), lambda b, qi, ki: (b, qi, 0)),
        out_shape=jax.ShapeDtypeStruct((BH, L, hd), q.dtype),
        scratch_shapes=[
            pltpu.VMEM((tq, 1), jnp.float32),   # running max
            pltpu.VMEM((tq, 1), jnp.float32),   # running denom
            pltpu.VMEM((tq, hd), jnp.float32),  # running numerator
        ],
        compiler_params=pltpu.CompilerParams(
            dimension_semantics=("parallel", "parallel", "arbitrary"),
            vmem_limit_bytes=VMEM_LIMIT),
    )(q, k, v)


def attn_out_ffn(attn2d, wo, bo, res, gamma, beta, w1, b1, w2, b2, *, tm, tf):
    M, E = res.shape
    F = w1.shape[1]
    return pl.pallas_call(
        attn_out_ffn_kernel,
        grid=(M // tm, F // tf),
        in_specs=[
            pl.BlockSpec((tm, E), lambda i, f: (i, 0)),   # attn (bf16)
            pl.BlockSpec((E, E), lambda i, f: (0, 0)),    # Wo (bf16)
            pl.BlockSpec((1, E), lambda i, f: (0, 0)),    # bo
            pl.BlockSpec((tm, E), lambda i, f: (i, 0)),   # residual (f32)
            pl.BlockSpec((1, E), lambda i, f: (0, 0)),    # norm2 gamma
            pl.BlockSpec((1, E), lambda i, f: (0, 0)),    # norm2 beta
            pl.BlockSpec((E, tf), lambda i, f: (0, f)),   # W1 tile (bf16)
            pl.BlockSpec((1, tf), lambda i, f: (0, f)),   # b1 tile
            pl.BlockSpec((tf, E), lambda i, f: (f, 0)),   # W2 tile (bf16)
            pl.BlockSpec((1, E), lambda i, f: (0, 0)),    # b2
        ],
        out_specs=pl.BlockSpec((tm, E), lambda i, f: (i, 0)),
        out_shape=jax.ShapeDtypeStruct((M, E), jnp.float32),
        scratch_shapes=[
            pltpu.VMEM((tm, E), jnp.float32),    # x = res + out_proj(attn)
            pltpu.VMEM((tm, E), jnp.bfloat16),   # norm2(x), MXU-ready
            pltpu.VMEM((tm, E), jnp.float32),    # FFN output accumulator
        ],
        compiler_params=pltpu.CompilerParams(
            dimension_semantics=("parallel", "arbitrary"),
            vmem_limit_bytes=VMEM_LIMIT),
    )(attn2d, wo, bo, res, gamma, beta, w1, b1, w2, b2)


# -------------------------------------------------- parameter preparation ---

def prepare_params(p, *, nhead):
    """One-time, host-side parameter transforms:
      * fold 1/sqrt(head_dim) into the Q columns of the in-projection,
      * cast matmul weights to bf16 (MXU native); biases / LN params stay f32.
    """
    E = p["norm1_g"].shape[-1]
    scale = 1.0 / math.sqrt(E // nhead)
    in_w = p["in_proj_w"].at[:, :E].multiply(scale)
    in_b = p["in_proj_b"].at[:, :E].multiply(scale)
    bf = jnp.bfloat16
    return {
        "in_proj_w": in_w.astype(bf), "in_proj_b": in_b,
        "out_proj_w": p["out_proj_w"].astype(bf), "out_proj_b": p["out_proj_b"],
        "norm1_g": p["norm1_g"], "norm1_b": p["norm1_b"],
        "norm2_g": p["norm2_g"], "norm2_b": p["norm2_b"],
        "lin1_w": p["lin1_w"].astype(bf), "lin1_b": p["lin1_b"],
        "lin2_w": p["lin2_w"].astype(bf), "lin2_b": p["lin2_b"],
    }


# -------------------------------------------------------- forward pass ------

def transformer_encoder_block(src, prep, *, nhead, tm=256, tf=512,
                              tq=128, tk=256):
    L, N, E = src.shape
    H = nhead
    hd = E // H
    M = L * N

    tm = _tile(M, tm)
    tf = _tile(prep["lin1_w"].shape[1], tf, mult=128)
    tq = _tile(L, tq)
    tk = _tile(L, tk)

    x2 = src.reshape(M, E)        # row index = l*N + n (seq-first layout)

    # --- self-attention branch: self_attn(norm1(src), norm1(src), norm1(src))
    q2, k2, v2 = ln_qkv_proj(x2, prep["norm1_g"], prep["norm1_b"],
                             prep["in_proj_w"], prep["in_proj_b"], tm=tm)

    # TODO(synk): these head-layout transposes are plain-JAX (now bf16, half
    # the bytes of the old f32 path); emitting head-major layout from kernel A
    # / consuming it directly in kernel D needs an in-kernel relayout or
    # hd >= 128 for lane-valid per-head blocks.
    def to_heads(t):              # (M, E) -> (N*H, L, hd), matches torch MHA
        return (t.reshape(L, N, H, hd)
                 .transpose(1, 2, 0, 3)
                 .reshape(N * H, L, hd))

    attn = flash_attention(to_heads(q2), to_heads(k2), to_heads(v2),
                           tq=tq, tk=tk)                    # (N*H, L, hd) bf16
    attn2d = (attn.reshape(N, H, L, hd)
                   .transpose(2, 0, 1, 3)
                   .reshape(M, E))

    # --- out-proj + residual + norm2 + FFN + residual, single fused kernel
    out2 = attn_out_ffn(attn2d, prep["out_proj_w"], prep["out_proj_b"], x2,
                        prep["norm2_g"], prep["norm2_b"],
                        prep["lin1_w"], prep["lin1_b"],
                        prep["lin2_w"], prep["lin2_b"], tm=tm, tf=tf)

    return out2.reshape(L, N, E)


# ---------------------------------------------------- pure-JAX reference ----

def reference_block(src, p, nhead):
    L, N, E = src.shape
    H = nhead
    hd = E // H

    def ln(x, g, b):
        mu = x.mean(-1, keepdims=True)
        var = ((x - mu) ** 2).mean(-1, keepdims=True)
        return (x - mu) / jnp.sqrt(var + EPS) * g + b

    xn = ln(src, p["norm1_g"][0], p["norm1_b"][0])
    qkv = xn @ p["in_proj_w"] + p["in_proj_b"][0]
    q, k, v = jnp.split(qkv, 3, axis=-1)

    def heads(t):
        return t.reshape(L, N, H, hd).transpose(1, 2, 0, 3).reshape(N * H, L, hd)

    qh, kh, vh = heads(q), heads(k), heads(v)
    s = jnp.einsum("bqd,bkd->bqk", qh / math.sqrt(hd), kh)
    pr = jax.nn.softmax(s, axis=-1)
    a = jnp.einsum("bqk,bkd->bqd", pr, vh)
    a = a.reshape(N, H, L, hd).transpose(2, 0, 1, 3).reshape(L, N, E)
    src = src + (a @ p["out_proj_w"] + p["out_proj_b"][0])

    yn = ln(src, p["norm2_g"][0], p["norm2_b"][0])
    h = jnp.maximum(yn @ p["lin1_w"] + p["lin1_b"][0], 0.0)
    return src + (h @ p["lin2_w"] + p["lin2_b"][0])


# -------------------------------------------------------------- main --------

if __name__ == "__main__":
    # small shapes: seq=16, batch=2, d_model=32, nhead=4, dim_feedforward=256
    L, N, E, H, F = 16, 2, 32, 4, 256
    key = jax.random.PRNGKey(0)
    ks = jax.random.split(key, 10)

    def init(k, shape, scale=0.02):
        return (scale * jax.random.normal(k, shape)).astype(jnp.float32)

    src = init(ks[0], (L, N, E), scale=1.0)

    # weights stored pre-transposed as (in_features, out_features)
    params = {
        "in_proj_w":  init(ks[1], (E, 3 * E)),
        "in_proj_b":  init(ks[2], (1, 3 * E)),
        "out_proj_w": init(ks[3], (E, E)),
        "out_proj_b": init(ks[4], (1, E)),
        "norm1_g":    jnp.ones((1, E), jnp.float32),
        "norm1_b":    jnp.zeros((1, E), jnp.float32),
        "norm2_g":    jnp.ones((1, E), jnp.float32),
        "norm2_b":    jnp.zeros((1, E), jnp.float32),
        "lin1_w":     init(ks[5], (E, F)),
        "lin1_b":     init(ks[6], (1, F)),
        "lin2_w":     init(ks[7], (F, E)),
        "lin2_b":     init(ks[8], (1, E)),
    }

    # one-time prep: bf16 weights + folded attention scale
    prep = prepare_params(params, nhead=H)

    # small tiles so the multi-step grids (M tiles, F accumulation, kv online
    # softmax) are actually exercised at these toy shapes.
    fwd = jax.jit(functools.partial(transformer_encoder_block, nhead=H,
                                    tm=8, tf=128, tq=8, tk=8))

    out = jax.block_until_ready(fwd(src, prep))
    ref = jax.block_until_ready(reference_block(src, params, H))

    assert out.shape == (L, N, E)
    max_err = float(jnp.max(jnp.abs(out - ref)))
    # bf16 matmul operands vs f32 reference: typical transformer tolerance
    assert max_err < 2e-2, f"mismatch vs reference (max abs err {max_err})"

    print("KERNEL_OK")
</pallas_src>

<mosaic_0001>
module attributes {stable_mosaic.version = 11 : i64} {
  func.func @flash_attn_kernel(%arg0: i32, %arg1: i32, %arg2: i32, %arg3: memref<1x8x8xbf16, #tpu.memory_space<vmem>>, %arg4: memref<1x8x8xbf16, #tpu.memory_space<vmem>>, %arg5: memref<1x8x8xbf16, #tpu.memory_space<vmem>>, %arg6: memref<1x8x8xbf16, #tpu.memory_space<vmem>>, %arg7: memref<8x1xf32, #tpu.memory_space<vmem>>, %arg8: memref<8x1xf32, #tpu.memory_space<vmem>>, %arg9: memref<8x8xf32, #tpu.memory_space<vmem>>) attributes {dimension_semantics = [#tpu.dimension_semantics<parallel>, #tpu.dimension_semantics<parallel>, #tpu.dimension_semantics<arbitrary>], iteration_bounds = array<i64: 8, 2, 2>, scalar_prefetch = 0 : i64, scratch_operands = 3 : i64, tpu.core_type = #tpu.core_type<tc>, window_params = [{transform_indices = @transform_0, window_bounds = array<i64: 1, 8, 8>}, {transform_indices = @transform_1, window_bounds = array<i64: 1, 8, 8>}, {transform_indices = @transform_2, window_bounds = array<i64: 1, 8, 8>}, {transform_indices = @transform_3, window_bounds = array<i64: 1, 8, 8>}]} {
    %c0_i32 = arith.constant 0 : i32
    %0 = arith.cmpi eq, %arg2, %c0_i32 : i32
    %1 = arith.extui %0 : i1 to i32
    %c0_i32_0 = arith.constant 0 : i32
    %2 = arith.cmpi ne, %1, %c0_i32_0 : i32
    scf.if %2 {
      %cst_25 = arith.constant 0xFF800000 : f32
      %36 = vector.broadcast %cst_25 : f32 to vector<8x1xf32>
      %c0_26 = arith.constant 0 : index
      %c0_27 = arith.constant 0 : index
      %37 = vector.load %arg7[%c0_26, %c0_27] : memref<8x1xf32, #tpu.memory_space<vmem>>, vector<8x1xf32>
      tpu.vector_store %arg7[%c0_26, %c0_27], %36 {strides = array<i32>} : memref<8x1xf32, #tpu.memory_space<vmem>>, vector<8x1xf32>,
      %cst_28 = arith.constant 0.000000e+00 : f32
      %38 = vector.broadcast %cst_28 : f32 to vector<8x1xf32>
      %c0_29 = arith.constant 0 : index
      %c0_30 = arith.constant 0 : index
      %39 = vector.load %arg8[%c0_29, %c0_30] : memref<8x1xf32, #tpu.memory_space<vmem>>, vector<8x1xf32>
      tpu.vector_store %arg8[%c0_29, %c0_30], %38 {strides = array<i32>} : memref<8x1xf32, #tpu.memory_space<vmem>>, vector<8x1xf32>,
      %cst_31 = arith.constant 0.000000e+00 : f32
      %40 = vector.broadcast %cst_31 : f32 to vector<8x8xf32>
      %c0_32 = arith.constant 0 : index
      %c0_33 = arith.constant 0 : index
      %41 = vector.load %arg9[%c0_32, %c0_33] : memref<8x8xf32, #tpu.memory_space<vmem>>, vector<8x8xf32>
      tpu.vector_store %arg9[%c0_32, %c0_33], %40 {strides = array<i32>} : memref<8x8xf32, #tpu.memory_space<vmem>>, vector<8x8xf32>,
    } else {
    }
    %c0 = arith.constant 0 : index
    %c0_1 = arith.constant 0 : index
    %c0_2 = arith.constant 0 : index
    %3 = vector.load %arg3[%c0, %c0_1, %c0_2] : memref<1x8x8xbf16, #tpu.memory_space<vmem>>, vector<1x8x8xbf16>
    %4 = vector.shape_cast %3 : vector<1x8x8xbf16> to vector<8x8xbf16>
    %c0_3 = arith.constant 0 : index
    %c0_4 = arith.constant 0 : index
    %c0_5 = arith.constant 0 : index
    %5 = vector.load %arg4[%c0_3, %c0_4, %c0_5] : memref<1x8x8xbf16, #tpu.memory_space<vmem>>, vector<1x8x8xbf16>
    %6 = vector.shape_cast %5 : vector<1x8x8xbf16> to vector<8x8xbf16>
    %cst = arith.constant dense<0.000000e+00> : vector<8x8xf32>
    %7 = tpu.matmul %4, %6, %cst {dimension_numbers = #tpu.dot_dimension_numbers<[1], [1], [0], [0], [0, 0, 1, 0], [], []>} : vector<8x8xbf16>, vector<8x8xbf16>, vector<8x8xf32> -> vector<8x8xf32>
    %c0_6 = arith.constant 0 : index
    %c0_7 = arith.constant 0 : index
    %8 = vector.load %arg7[%c0_6, %c0_7] : memref<8x1xf32, #tpu.memory_space<vmem>>, vector<8x1xf32>
    %cst_8 = arith.constant dense<0xFF800000> : vector<8xf32>
    %9 = vector.multi_reduction <maximumf>, %7, %cst_8 [1] : vector<8x8xf32> to vector<8xf32>
    %10 = vector.shape_cast %9 : vector<8xf32> to vector<8x1xf32>
    %11 = arith.maximumf %8, %10 : vector<8x1xf32>
    %12 = arith.subf %8, %11 : vector<8x1xf32>
    %13 = math.exp %12 : vector<8x1xf32>
    %14 = vector.broadcast %11 : vector<8x1xf32> to vector<8x8xf32>
    %15 = arith.subf %7, %14 : vector<8x8xf32>
    %16 = math.exp %15 : vector<8x8xf32>
    %c0_9 = arith.constant 0 : index
    %c0_10 = arith.constant 0 : index
    %17 = vector.load %arg8[%c0_9, %c0_10] : memref<8x1xf32, #tpu.memory_space<vmem>>, vector<8x1xf32>
    %18 = arith.mulf %13, %17 : vector<8x1xf32>
    %cst_11 = arith.constant dense<0.000000e+00> : vector<8xf32>
    %19 = vector.multi_reduction <add>, %16, %cst_11 [1] : vector<8x8xf32> to vector<8xf32>
    %20 = vector.shape_cast %19 : vector<8xf32> to vector<8x1xf32>
    %21 = arith.addf %18, %20 : vector<8x1xf32>
    %c0_12 = arith.constant 0 : index
    %c0_13 = arith.constant 0 : index
    %22 = vector.load %arg8[%c0_12, %c0_13] : memref<8x1xf32, #tpu.memory_space<vmem>>, vector<8x1xf32>
    tpu.vector_store %arg8[%c0_12, %c0_13], %21 {strides = array<i32>} : memref<8x1xf32, #tpu.memory_space<vmem>>, vector<8x1xf32>,
    %c0_14 = arith.constant 0 : index
    %c0_15 = arith.constant 0 : index
    %23 = vector.load %arg9[%c0_14, %c0_15] : memref<8x8xf32, #tpu.memory_space<vmem>>, vector<8x8xf32>
    %24 = vector.broadcast %13 : vector<8x1xf32> to vector<8x8xf32>
    %25 = arith.mulf %24, %23 : vector<8x8xf32>
    %26 = arith.truncf %16 : vector<8x8xf32> to vector<8x8xbf16>
    %c0_16 = arith.constant 0 : index
    %c0_17 = arith.constant 0 : index
    %c0_18 = arith.constant 0 : index
    %27 = vector.load %arg5[%c0_16, %c0_17, %c0_18] : memref<1x8x8xbf16, #tpu.memory_space<vmem>>, vector<1x8x8xbf16>
    %28 = vector.shape_cast %27 : vector<1x8x8xbf16> to vector<8x8xbf16>
    %cst_19 = arith.constant dense<0.000000e+00> : vector<8x8xf32>
    %29 = tpu.matmul %26, %28, %cst_19 {dimension_numbers = #tpu.dot_dimension_numbers<[1], [0], [0], [1], [0, 0, 1, 1], [], []>} : vector<8x8xbf16>, vector<8x8xbf16>, vector<8x8xf32> -> vector<8x8xf32>
    %30 = arith.addf %25, %29 : vector<8x8xf32>
    %c0_20 = arith.constant 0 : index
    %c0_21 = arith.constant 0 : index
    %31 = vector.load %arg9[%c0_20, %c0_21] : memref<8x8xf32, #tpu.memory_space<vmem>>, vector<8x8xf32>
    tpu.vector_store %arg9[%c0_20, %c0_21], %30 {strides = array<i32>} : memref<8x8xf32, #tpu.memory_space<vmem>>, vector<8x8xf32>,
    %c0_22 = arith.constant 0 : index
    %c0_23 = arith.constant 0 : index
    %32 = vector.load %arg7[%c0_22, %c0_23] : memref<8x1xf32, #tpu.memory_space<vmem>>, vector<8x1xf32>
    tpu.vector_store %arg7[%c0_22, %c0_23], %11 {strides = array<i32>} : memref<8x1xf32, #tpu.memory_space<vmem>>, vector<8x1xf32>,
    %c1_i32 = arith.constant 1 : i32
    %33 = arith.cmpi eq, %arg2, %c1_i32 : i32
    %34 = arith.extui %33 : i1 to i32
    %c0_i32_24 = arith.constant 0 : i32
    %35 = arith.cmpi ne, %34, %c0_i32_24 : i32
    scf.if %35 {
      %c0_25 = arith.constant 0 : index
      %c0_26 = arith.constant 0 : index
      %36 = vector.load %arg8[%c0_25, %c0_26] : memref<8x1xf32, #tpu.memory_space<vmem>>, vector<8x1xf32>
      %37 = tpu.reciprocal %36 {approx = true} : vector<8x1xf32> -> vector<8x1xf32>
      %c0_27 = arith.constant 0 : index
      %c0_28 = arith.constant 0 : index
      %38 = vector.load %arg9[%c0_27, %c0_28] : memref<8x8xf32, #tpu.memory_space<vmem>>, vector<8x8xf32>
      %39 = vector.broadcast %37 : vector<8x1xf32> to vector<8x8xf32>
      %40 = arith.mulf %38, %39 : vector<8x8xf32>
      %41 = arith.truncf %40 : vector<8x8xf32> to vector<8x8xbf16>
      %c0_29 = arith.constant 0 : index
      %c0_30 = arith.constant 0 : index
      %c0_31 = arith.constant 0 : index
      %42 = vector.load %arg6[%c0_29, %c0_30, %c0_31] : memref<1x8x8xbf16, #tpu.memory_space<vmem>>, vector<1x8x8xbf16>
      %43 = vector.shape_cast %42 : vector<1x8x8xbf16> to vector<8x8xbf16>
      %44 = vector.shape_cast %41 : vector<8x8xbf16> to vector<1x8x8xbf16>
      tpu.vector_store %arg6[%c0_29, %c0_30, %c0_31], %44 {strides = array<i32>} : memref<1x8x8xbf16, #tpu.memory_space<vmem>>, vector<1x8x8xbf16>,
    } else {
    }
    return
  }
  func.func @transform_0(%arg0: i32, %arg1: i32, %arg2: i32) -> (i32, i32, i32) {
    %c0_i32 = arith.constant 0 : i32
    %c0_i32_0 = arith.constant 0 : i32
    return %arg0, %arg1, %c0_i32 : i32, i32, i32
  }
  func.func @transform_1(%arg0: i32, %arg1: i32, %arg2: i32) -> (i32, i32, i32) {
    %c0_i32 = arith.constant 0 : i32
    %c0_i32_0 = arith.constant 0 : i32
    return %arg0, %arg2, %c0_i32 : i32, i32, i32
  }
  func.func @transform_2(%arg0: i32, %arg1: i32, %arg2: i32) -> (i32, i32, i32) {
    %c0_i32 = arith.constant 0 : i32
    %c0_i32_0 = arith.constant 0 : i32
    return %arg0, %arg2, %c0_i32 : i32, i32, i32
  }
  func.func @transform_3(%arg0: i32, %arg1: i32, %arg2: i32) -> (i32, i32, i32) {
    %c0_i32 = arith.constant 0 : i32
    %c0_i32_0 = arith.constant 0 : i32
    return %arg0, %arg1, %c0_i32 : i32, i32, i32
  }
}

module attributes {stable_mosaic.version = 11 : i64} {
  func.func @ln_qkv_kernel(%arg0: i32, %arg1: memref<8x32xf32, #tpu.memory_space<vmem>>, %arg2: memref<1x32xf32, #tpu.memory_space<vmem>>, %arg3: memref<1x32xf32, #tpu.memory_space<vmem>>, %arg4: memref<32x96xbf16, #tpu.memory_space<vmem>>, %arg5: memref<1x96xf32, #tpu.memory_space<vmem>>, %arg6: memref<8x32xbf16, #tpu.memory_space<vmem>>, %arg7: memref<8x32xbf16, #tpu.memory_space<vmem>>, %arg8: memref<8x32xbf16, #tpu.memory_space<vmem>>) attributes {dimension_semantics = [#tpu.dimension_semantics<parallel>], iteration_bounds = array<i64: 4>, scalar_prefetch = 0 : i64, scratch_operands = 0 : i64, tpu.core_type = #tpu.core_type<tc>, window_params = [{transform_indices = @transform_0, window_bounds = array<i64: 8, 32>}, {pipeline_mode = #tpu.pipeline_mode<synchronous>, transform_indices = @transform_1, window_bounds = array<i64: 1, 32>}, {pipeline_mode = #tpu.pipeline_mode<synchronous>, transform_indices = @transform_2, window_bounds = array<i64: 1, 32>}, {pipeline_mode = #tpu.pipeline_mode<synchronous>, transform_indices = @transform_3, window_bounds = array<i64: 32, 96>}, {pipeline_mode = #tpu.pipeline_mode<synchronous>, transform_indices = @transform_4, window_bounds = array<i64: 1, 96>}, {transform_indices = @transform_5, window_bounds = array<i64: 8, 32>}, {transform_indices = @transform_6, window_bounds = array<i64: 8, 32>}, {transform_indices = @transform_7, window_bounds = array<i64: 8, 32>}]} {
    %c0 = arith.constant 0 : index
    %c0_0 = arith.constant 0 : index
    %0 = vector.load %arg1[%c0, %c0_0] : memref<8x32xf32, #tpu.memory_space<vmem>>, vector<8x32xf32>
    %cst = arith.constant dense<0.000000e+00> : vector<8xf32>
    %1 = vector.multi_reduction <add>, %0, %cst [1] : vector<8x32xf32> to vector<8xf32>
    %2 = vector.shape_cast %1 : vector<8xf32> to vector<8x1xf32>
    %cst_1 = arith.constant 3.200000e+01 : f32
    %3 = vector.broadcast %cst_1 : f32 to vector<8x1xf32>
    %4 = arith.divf %2, %3 : vector<8x1xf32>
    %5 = vector.broadcast %4 : vector<8x1xf32> to vector<8x32xf32>
    %6 = arith.subf %0, %5 : vector<8x32xf32>
    %7 = arith.mulf %6, %6 : vector<8x32xf32>
    %cst_2 = arith.constant dense<0.000000e+00> : vector<8xf32>
    %8 = vector.multi_reduction <add>, %7, %cst_2 [1] : vector<8x32xf32> to vector<8xf32>
    %9 = vector.shape_cast %8 : vector<8xf32> to vector<8x1xf32>
    %cst_3 = arith.constant 3.200000e+01 : f32
    %10 = vector.broadcast %cst_3 : f32 to vector<8x1xf32>
    %11 = arith.divf %9, %10 : vector<8x1xf32>
    %12 = vector.broadcast %4 : vector<8x1xf32> to vector<8x32xf32>
    %13 = arith.subf %0, %12 : vector<8x32xf32>
    %cst_4 = arith.constant 9.99999974E-6 : f32
    %14 = vector.broadcast %cst_4 : f32 to vector<8x1xf32>
    %15 = arith.addf %11, %14 : vector<8x1xf32>
    %16 = math.rsqrt %15 : vector<8x1xf32>
    %17 = vector.broadcast %16 : vector<8x1xf32> to vector<8x32xf32>
    %18 = arith.mulf %13, %17 : vector<8x32xf32>
    %c0_5 = arith.constant 0 : index
    %c0_6 = arith.constant 0 : index
    %19 = vector.load %arg2[%c0_5, %c0_6] : memref<1x32xf32, #tpu.memory_space<vmem>>, vector<1x32xf32>
    %20 = vector.broadcast %19 : vector<1x32xf32> to vector<8x32xf32>
    %21 = arith.mulf %18, %20 : vector<8x32xf32>
    %c0_7 = arith.constant 0 : index
    %c0_8 = arith.constant 0 : index
    %22 = vector.load %arg3[%c0_7, %c0_8] : memref<1x32xf32, #tpu.memory_space<vmem>>, vector<1x32xf32>
    %23 = vector.broadcast %22 : vector<1x32xf32> to vector<8x32xf32>
    %24 = arith.addf %21, %23 : vector<8x32xf32>
    %25 = arith.truncf %24 : vector<8x32xf32> to vector<8x32xbf16>
    %c0_9 = arith.constant 0 : index
    %c0_10 = arith.constant 0 : index
    %26 = vector.load %arg4[%c0_9, %c0_10] : memref<32x96xbf16, #tpu.memory_space<vmem>>, vector<32x96xbf16>
    %cst_11 = arith.constant dense<0.000000e+00> : vector<8x96xf32>
    %27 = tpu.matmul %25, %26, %cst_11 {dimension_numbers = #tpu.dot_dimension_numbers<[1], [0], [0], [1], [0, 0, 1, 1], [], []>} : vector<8x32xbf16>, vector<32x96xbf16>, vector<8x96xf32> -> vector<8x96xf32>
    %c0_12 = arith.constant 0 : index
    %c0_13 = arith.constant 0 : index
    %28 = vector.load %arg5[%c0_12, %c0_13] : memref<1x96xf32, #tpu.memory_space<vmem>>, vector<1x96xf32>
    %29 = vector.broadcast %28 : vector<1x96xf32> to vector<8x96xf32>
    %30 = arith.addf %27, %29 : vector<8x96xf32>
    %31 = vector.extract_strided_slice %30 {offsets = [0, 0], sizes = [8, 32], strides = [1, 1]} : vector<8x96xf32> to vector<8x32xf32>
    %32 = arith.truncf %31 : vector<8x32xf32> to vector<8x32xbf16>
    %c0_14 = arith.constant 0 : index
    %c0_15 = arith.constant 0 : index
    %33 = vector.load %arg6[%c0_14, %c0_15] : memref<8x32xbf16, #tpu.memory_space<vmem>>, vector<8x32xbf16>
    tpu.vector_store %arg6[%c0_14, %c0_15], %32 {strides = array<i32>} : memref<8x32xbf16, #tpu.memory_space<vmem>>, vector<8x32xbf16>,
    %34 = vector.extract_strided_slice %30 {offsets = [0, 32], sizes = [8, 32], strides = [1, 1]} : vector<8x96xf32> to vector<8x32xf32>
    %35 = arith.truncf %34 : vector<8x32xf32> to vector<8x32xbf16>
    %c0_16 = arith.constant 0 : index
    %c0_17 = arith.constant 0 : index
    %36 = vector.load %arg7[%c0_16, %c0_17] : memref<8x32xbf16, #tpu.memory_space<vmem>>, vector<8x32xbf16>
    tpu.vector_store %arg7[%c0_16, %c0_17], %35 {strides = array<i32>} : memref<8x32xbf16, #tpu.memory_space<vmem>>, vector<8x32xbf16>,
    %37 = vector.extract_strided_slice %30 {offsets = [0, 64], sizes = [8, 32], strides = [1, 1]} : vector<8x96xf32> to vector<8x32xf32>
    %38 = arith.truncf %37 : vector<8x32xf32> to vector<8x32xbf16>
    %c0_18 = arith.constant 0 : index
    %c0_19 = arith.constant 0 : index
    %39 = vector.load %arg8[%c0_18, %c0_19] : memref<8x32xbf16, #tpu.memory_space<vmem>>, vector<8x32xbf16>
    tpu.vector_store %arg8[%c0_18, %c0_19], %38 {strides = array<i32>} : memref<8x32xbf16, #tpu.memory_space<vmem>>, vector<8x32xbf16>,
    return
  }
  func.func @transform_0(%arg0: i32) -> (i32, i32) {
    %c0_i32 = arith.constant 0 : i32
    %c0_i32_0 = arith.constant 0 : i32
    return %arg0, %c0_i32 : i32, i32
  }
  func.func @transform_1(%arg0: i32) -> (i32, i32) {
    %c0_i32 = arith.constant 0 : i32
    %c0_i32_0 = arith.constant 0 : i32
    %c0_i32_1 = arith.constant 0 : i32
    return %c0_i32, %c0_i32_0 : i32, i32
  }
  func.func @transform_2(%arg0: i32) -> (i32, i32) {
    %c0_i32 = arith.constant 0 : i32
    %c0_i32_0 = arith.constant 0 : i32
    %c0_i32_1 = arith.constant 0 : i32
    return %c0_i32, %c0_i32_0 : i32, i32
  }
  func.func @transform_3(%arg0: i32) -> (i32, i32) {
    %c0_i32 = arith.constant 0 : i32
    %c0_i32_0 = arith.constant 0 : i32
    %c0_i32_1 = arith.constant 0 : i32
    return %c0_i32, %c0_i32_0 : i32, i32
  }
  func.func @transform_4(%arg0: i32) -> (i32, i32) {
    %c0_i32 = arith.constant 0 : i32
    %c0_i32_0 = arith.constant 0 : i32
    %c0_i32_1 = arith.constant 0 : i32
    return %c0_i32, %c0_i32_0 : i32, i32
  }
  func.func @transform_5(%arg0: i32) -> (i32, i32) {
    %c0_i32 = arith.constant 0 : i32
    %c0_i32_0 = arith.constant 0 : i32
    return %arg0, %c0_i32 : i32, i32
  }
  func.func @transform_6(%arg0: i32) -> (i32, i32) {
    %c0_i32 = arith.constant 0 : i32
    %c0_i32_0 = arith.constant 0 : i32
    return %arg0, %c0_i32 : i32, i32
  }
  func.func @transform_7(%arg0: i32) -> (i32, i32) {
    %c0_i32 = arith.constant 0 : i32
    %c0_i32_0 = arith.constant 0 : i32
    return %arg0, %c0_i32 : i32, i32
  }
}

module attributes {stable_mosaic.version = 11 : i64} {
  func.func @attn_out_ffn_kernel(%arg0: i32, %arg1: i32, %arg2: memref<8x32xbf16, #tpu.memory_space<vmem>>, %arg3: memref<32x32xbf16, #tpu.memory_space<vmem>>, %arg4: memref<1x32xf32, #tpu.memory_space<vmem>>, %arg5: memref<8x32xf32, #tpu.memory_space<vmem>>, %arg6: memref<1x32xf32, #tpu.memory_space<vmem>>, %arg7: memref<1x32xf32, #tpu.memory_space<vmem>>, %arg8: memref<32x128xbf16, #tpu.memory_space<vmem>>, %arg9: memref<1x128xf32, #tpu.memory_space<vmem>>, %arg10: memref<128x32xbf16, #tpu.memory_space<vmem>>, %arg11: memref<1x32xf32, #tpu.memory_space<vmem>>, %arg12: memref<8x32xf32, #tpu.memory_space<vmem>>, %arg13: memref<8x32xf32, #tpu.memory_space<vmem>>, %arg14: memref<8x32xbf16, #tpu.memory_space<vmem>>, %arg15: memref<8x32xf32, #tpu.memory_space<vmem>>) attributes {dimension_semantics = [#tpu.dimension_semantics<parallel>, #tpu.dimension_semantics<arbitrary>], iteration_bounds = array<i64: 4, 2>, scalar_prefetch = 0 : i64, scratch_operands = 3 : i64, tpu.core_type = #tpu.core_type<tc>, window_params = [{transform_indices = @transform_0, window_bounds = array<i64: 8, 32>}, {pipeline_mode = #tpu.pipeline_mode<synchronous>, transform_indices = @transform_1, window_bounds = array<i64: 32, 32>}, {pipeline_mode = #tpu.pipeline_mode<synchronous>, transform_indices = @transform_2, window_bounds = array<i64: 1, 32>}, {transform_indices = @transform_3, window_bounds = array<i64: 8, 32>}, {pipeline_mode = #tpu.pipeline_mode<synchronous>, transform_indices = @transform_4, window_bounds = array<i64: 1, 32>}, {pipeline_mode = #tpu.pipeline_mode<synchronous>, transform_indices = @transform_5, window_bounds = array<i64: 1, 32>}, {transform_indices = @transform_6, window_bounds = array<i64: 32, 128>}, {transform_indices = @transform_7, window_bounds = array<i64: 1, 128>}, {transform_indices = @transform_8, window_bounds = array<i64: 128, 32>}, {pipeline_mode = #tpu.pipeline_mode<synchronous>, transform_indices = @transform_9, window_bounds = array<i64: 1, 32>}, {transform_indices = @transform_10, window_bounds = array<i64: 8, 32>}]} {
    %c0_i32 = arith.constant 0 : i32
    %0 = arith.cmpi eq, %arg1, %c0_i32 : i32
    %1 = arith.extui %0 : i1 to i32
    %c0_i32_0 = arith.constant 0 : i32
    %2 = arith.cmpi ne, %1, %c0_i32_0 : i32
    scf.if %2 {
      %c0_15 = arith.constant 0 : index
      %c0_16 = arith.constant 0 : index
      %20 = vector.load %arg2[%c0_15, %c0_16] : memref<8x32xbf16, #tpu.memory_space<vmem>>, vector<8x32xbf16>
      %c0_17 = arith.constant 0 : index
      %c0_18 = arith.constant 0 : index
      %21 = vector.load %arg3[%c0_17, %c0_18] : memref<32x32xbf16, #tpu.memory_space<vmem>>, vector<32x32xbf16>
      %cst_19 = arith.constant dense<0.000000e+00> : vector<8x32xf32>
      %22 = tpu.matmul %20, %21, %cst_19 {dimension_numbers = #tpu.dot_dimension_numbers<[1], [0], [0], [1], [0, 0, 1, 1], [], []>} : vector<8x32xbf16>, vector<32x32xbf16>, vector<8x32xf32> -> vector<8x32xf32>
      %c0_20 = arith.constant 0 : index
      %c0_21 = arith.constant 0 : index
      %23 = vector.load %arg4[%c0_20, %c0_21] : memref<1x32xf32, #tpu.memory_space<vmem>>, vector<1x32xf32>
      %24 = vector.broadcast %23 : vector<1x32xf32> to vector<8x32xf32>
      %25 = arith.addf %22, %24 : vector<8x32xf32>
      %c0_22 = arith.constant 0 : index
      %c0_23 = arith.constant 0 : index
      %26 = vector.load %arg5[%c0_22, %c0_23] : memref<8x32xf32, #tpu.memory_space<vmem>>, vector<8x32xf32>
      %27 = arith.addf %26, %25 : vector<8x32xf32>
      %c0_24 = arith.constant 0 : index
      %c0_25 = arith.constant 0 : index
      %28 = vector.load %arg13[%c0_24, %c0_25] : memref<8x32xf32, #tpu.memory_space<vmem>>, vector<8x32xf32>
      tpu.vector_store %arg13[%c0_24, %c0_25], %27 {strides = array<i32>} : memref<8x32xf32, #tpu.memory_space<vmem>>, vector<8x32xf32>,
      %cst_26 = arith.constant dense<0.000000e+00> : vector<8xf32>
      %29 = vector.multi_reduction <add>, %27, %cst_26 [1] : vector<8x32xf32> to vector<8xf32>
      %30 = vector.shape_cast %29 : vector<8xf32> to vector<8x1xf32>
      %cst_27 = arith.constant 3.200000e+01 : f32
      %31 = vector.broadcast %cst_27 : f32 to vector<8x1xf32>
      %32 = arith.divf %30, %31 : vector<8x1xf32>
      %33 = vector.broadcast %32 : vector<8x1xf32> to vector<8x32xf32>
      %34 = arith.subf %27, %33 : vector<8x32xf32>
      %35 = arith.mulf %34, %34 : vector<8x32xf32>
      %cst_28 = arith.constant dense<0.000000e+00> : vector<8xf32>
      %36 = vector.multi_reduction <add>, %35, %cst_28 [1] : vector<8x32xf32> to vector<8xf32>
      %37 = vector.shape_cast %36 : vector<8xf32> to vector<8x1xf32>
      %cst_29 = arith.constant 3.200000e+01 : f32
      %38 = vector.broadcast %cst_29 : f32 to vector<8x1xf32>
      %39 = arith.divf %37, %38 : vector<8x1xf32>
      %40 = vector.broadcast %32 : vector<8x1xf32> to vector<8x32xf32>
      %41 = arith.subf %27, %40 : vector<8x32xf32>
      %cst_30 = arith.constant 9.99999974E-6 : f32
      %42 = vector.broadcast %cst_30 : f32 to vector<8x1xf32>
      %43 = arith.addf %39, %42 : vector<8x1xf32>
      %44 = math.rsqrt %43 : vector<8x1xf32>
      %45 = vector.broadcast %44 : vector<8x1xf32> to vector<8x32xf32>
      %46 = arith.mulf %41, %45 : vector<8x32xf32>
      %c0_31 = arith.constant 0 : index
      %c0_32 = arith.constant 0 : index
      %47 = vector.load %arg6[%c0_31, %c0_32] : memref<1x32xf32, #tpu.memory_space<vmem>>, vector<1x32xf32>
      %48 = vector.broadcast %47 : vector<1x32xf32> to vector<8x32xf32>
      %49 = arith.mulf %46, %48 : vector<8x32xf32>
      %c0_33 = arith.constant 0 : index
      %c0_34 = arith.constant 0 : index
      %50 = vector.load %arg7[%c0_33, %c0_34] : memref<1x32xf32, #tpu.memory_space<vmem>>, vector<1x32xf32>
      %51 = vector.broadcast %50 : vector<1x32xf32> to vector<8x32xf32>
      %52 = arith.addf %49, %51 : vector<8x32xf32>
      %53 = arith.truncf %52 : vector<8x32xf32> to vector<8x32xbf16>
      %c0_35 = arith.constant 0 : index
      %c0_36 = arith.constant 0 : index
      %54 = vector.load %arg14[%c0_35, %c0_36] : memref<8x32xbf16, #tpu.memory_space<vmem>>, vector<8x32xbf16>
      tpu.vector_store %arg14[%c0_35, %c0_36], %53 {strides = array<i32>} : memref<8x32xbf16, #tpu.memory_space<vmem>>, vector<8x32xbf16>,
      %cst_37 = arith.constant 0.000000e+00 : f32
      %55 = vector.broadcast %cst_37 : f32 to vector<8x32xf32>
      %c0_38 = arith.constant 0 : index
      %c0_39 = arith.constant 0 : index
      %56 = vector.load %arg15[%c0_38, %c0_39] : memref<8x32xf32, #tpu.memory_space<vmem>>, vector<8x32xf32>
      tpu.vector_store %arg15[%c0_38, %c0_39], %55 {strides = array<i32>} : memref<8x32xf32, #tpu.memory_space<vmem>>, vector<8x32xf32>,
    } else {
    }
    %c0 = arith.constant 0 : index
    %c0_1 = arith.constant 0 : index
    %3 = vector.load %arg14[%c0, %c0_1] : memref<8x32xbf16, #tpu.memory_space<vmem>>, vector<8x32xbf16>
    %c0_2 = arith.constant 0 : index
    %c0_3 = arith.constant 0 : index
    %4 = vector.load %arg8[%c0_2, %c0_3] : memref<32x128xbf16, #tpu.memory_space<vmem>>, vector<32x128xbf16>
    %cst = arith.constant dense<0.000000e+00> : vector<8x128xf32>
    %5 = tpu.matmul %3, %4, %cst {dimension_numbers = #tpu.dot_dimension_numbers<[1], [0], [0], [1], [0, 0, 1, 1], [], []>} : vector<8x32xbf16>, vector<32x128xbf16>, vector<8x128xf32> -> vector<8x128xf32>
    %c0_4 = arith.constant 0 : index
    %c0_5 = arith.constant 0 : index
    %6 = vector.load %arg9[%c0_4, %c0_5] : memref<1x128xf32, #tpu.memory_space<vmem>>, vector<1x128xf32>
    %7 = vector.broadcast %6 : vector<1x128xf32> to vector<8x128xf32>
    %8 = arith.addf %5, %7 : vector<8x128xf32>
    %cst_6 = arith.constant 0.000000e+00 : f32
    %9 = vector.broadcast %cst_6 : f32 to vector<8x128xf32>
    %10 = arith.maximumf %8, %9 : vector<8x128xf32>
    %c0_7 = arith.constant 0 : index
    %c0_8 = arith.constant 0 : index
    %11 = vector.load %arg15[%c0_7, %c0_8] : memref<8x32xf32, #tpu.memory_space<vmem>>, vector<8x32xf32>
    %12 = arith.truncf %10 : vector<8x128xf32> to vector<8x128xbf16>
    %c0_9 = arith.constant 0 : index
    %c0_10 = arith.constant 0 : index
    %13 = vector.load %arg10[%c0_9, %c0_10] : memref<128x32xbf16, #tpu.memory_space<vmem>>, vector<128x32xbf16>
    %cst_11 = arith.constant dense<0.000000e+00> : vector<8x32xf32>
    %14 = tpu.matmul %12, %13, %cst_11 {dimension_numbers = #tpu.dot_dimension_numbers<[1], [0], [0], [1], [0, 0, 1, 1], [], []>} : vector<8x128xbf16>, vector<128x32xbf16>, vector<8x32xf32> -> vector<8x32xf32>
    %15 = arith.addf %11, %14 : vector<8x32xf32>
    %c0_12 = arith.constant 0 : index
    %c0_13 = arith.constant 0 : index
    %16 = vector.load %arg15[%c0_12, %c0_13] : memref<8x32xf32, #tpu.memory_space<vmem>>, vector<8x32xf32>
    tpu.vector_store %arg15[%c0_12, %c0_13], %15 {strides = array<i32>} : memref<8x32xf32, #tpu.memory_space<vmem>>, vector<8x32xf32>,
    %c1_i32 = arith.constant 1 : i32
    %17 = arith.cmpi eq, %arg1, %c1_i32 : i32
    %18 = arith.extui %17 : i1 to i32
    %c0_i32_14 = arith.constant 0 : i32
    %19 = arith.cmpi ne, %18, %c0_i32_14 : i32
    scf.if %19 {
      %c0_15 = arith.constant 0 : index
      %c0_16 = arith.constant 0 : index
      %20 = vector.load %arg13[%c0_15, %c0_16] : memref<8x32xf32, #tpu.memory_space<vmem>>, vector<8x32xf32>
      %c0_17 = arith.constant 0 : index
      %c0_18 = arith.constant 0 : index
      %21 = vector.load %arg15[%c0_17, %c0_18] : memref<8x32xf32, #tpu.memory_space<vmem>>, vector<8x32xf32>
      %22 = arith.addf %20, %21 : vector<8x32xf32>
      %c0_19 = arith.constant 0 : index
      %c0_20 = arith.constant 0 : index
      %23 = vector.load %arg11[%c0_19, %c0_20] : memref<1x32xf32, #tpu.memory_space<vmem>>, vector<1x32xf32>
      %24 = vector.broadcast %23 : vector<1x32xf32> to vector<8x32xf32>
      %25 = arith.addf %22, %24 : vector<8x32xf32>
      %c0_21 = arith.constant 0 : index
      %c0_22 = arith.constant 0 : index
      %26 = vector.load %arg12[%c0_21, %c0_22] : memref<8x32xf32, #tpu.memory_space<vmem>>, vector<8x32xf32>
      tpu.vector_store %arg12[%c0_21, %c0_22], %25 {strides = array<i32>} : memref<8x32xf32, #tpu.memory_space<vmem>>, vector<8x32xf32>,
    } else {
    }
    return
  }
  func.func @transform_0(%arg0: i32, %arg1: i32) -> (i32, i32) {
    %c0_i32 = arith.constant 0 : i32
    %c0_i32_0 = arith.constant 0 : i32
    return %arg0, %c0_i32 : i32, i32
  }
  func.func @transform_1(%arg0: i32, %arg1: i32) -> (i32, i32) {
    %c0_i32 = arith.constant 0 : i32
    %c0_i32_0 = arith.constant 0 : i32
    %c0_i32_1 = arith.constant 0 : i32
    return %c0_i32, %c0_i32_0 : i32, i32
  }
  func.func @transform_2(%arg0: i32, %arg1: i32) -> (i32, i32) {
    %c0_i32 = arith.constant 0 : i32
    %c0_i32_0 = arith.constant 0 : i32
    %c0_i32_1 = arith.constant 0 : i32
    return %c0_i32, %c0_i32_0 : i32, i32
  }
  func.func @transform_3(%arg0: i32, %arg1: i32) -> (i32, i32) {
    %c0_i32 = arith.constant 0 : i32
    %c0_i32_0 = arith.constant 0 : i32
    return %arg0, %c0_i32 : i32, i32
  }
  func.func @transform_4(%arg0: i32, %arg1: i32) -> (i32, i32) {
    %c0_i32 = arith.constant 0 : i32
    %c0_i32_0 = arith.constant 0 : i32
    %c0_i32_1 = arith.constant 0 : i32
    return %c0_i32, %c0_i32_0 : i32, i32
  }
  func.func @transform_5(%arg0: i32, %arg1: i32) -> (i32, i32) {
    %c0_i32 = arith.constant 0 : i32
    %c0_i32_0 = arith.constant 0 : i32
    %c0_i32_1 = arith.constant 0 : i32
    return %c0_i32, %c0_i32_0 : i32, i32
  }
  func.func @transform_6(%arg0: i32, %arg1: i32) -> (i32, i32) {
    %c0_i32 = arith.constant 0 : i32
    %c0_i32_0 = arith.constant 0 : i32
    return %c0_i32, %arg1 : i32, i32
  }
  func.func @transform_7(%arg0: i32, %arg1: i32) -> (i32, i32) {
    %c0_i32 = arith.constant 0 : i32
    %c0_i32_0 = arith.constant 0 : i32
    return %c0_i32, %arg1 : i32, i32
  }
  func.func @transform_8(%arg0: i32, %arg1: i32) -> (i32, i32) {
    %c0_i32 = arith.constant 0 : i32
    %c0_i32_0 = arith.constant 0 : i32
    return %arg1, %c0_i32 : i32, i32
  }
  func.func @transform_9(%arg0: i32, %arg1: i32) -> (i32, i32) {
    %c0_i32 = arith.constant 0 : i32
    %c0_i32_0 = arith.constant 0 : i32
    %c0_i32_1 = arith.constant 0 : i32
    return %c0_i32, %c0_i32_0 : i32, i32
  }
  func.func @transform_10(%arg0: i32, %arg1: i32) -> (i32, i32) {
    %c0_i32 = arith.constant 0 : i32
    %c0_i32_0 = arith.constant 0 : i32
    return %arg0, %c0_i32 : i32, i32
  }
}

</mosaic_0001>

<llo_original>
// kernel: transformer_encoder_block.4
$region0: #{transformer_encoder_block.4}
  #allocation0 [shape = 'u32[]', space=smem, size = 0x4, offset = 0x4, fixed_abs, tag = 'smem constant byte address 0x4 - core index']
  #allocation1 [shape = 'u32[144,128]{1,0:T(1,128)}', space=vmem, size = 0x12000, scoped, tag = 'internal scratch']
  #allocation2 [shape = 'f32[8,1]{1,0:T(8,128)}', space=vmem, size = 0x1000, scoped, tag = 'scratch operand']
  #allocation3 [shape = 'f32[8,1]{1,0:T(8,128)}', space=vmem, size = 0x1000, scoped, tag = 'scratch operand']
  #allocation4 [shape = 'f32[8,8]{1,0:T(8,128)}', space=vmem, size = 0x1000, scoped, tag = 'scratch operand']
  %s0 = inlined_call_operand.vmem [shape: bf16[8,16,8], index: 0, kind: input, shape index: {}]
  %s1 = inlined_call_operand.vmem [shape: bf16[8,16,8], index: 1, kind: input, shape index: {}]
  %s2 = inlined_call_operand.vmem [shape: bf16[8,16,8], index: 2, kind: input, shape index: {}]
  %s3 = inlined_call_operand.vmem [shape: bf16[8,16,8], index: 3, kind: output, shape index: {}]
  %s4 = sld [smem:[#allocation0]]
  $region53: #{transformer_encoder_block.4} parent=0
    _
  %s6 = ssub.s32 1, %s4
  %s7 = scalar_select 0, %s6, %s4
  loop: start=0, step=1, limit=34
  $region2: #{transformer_encoder_block.4} parent=0 // loop_pre_header
    _
  $region3: #{transformer_encoder_block.4} parent=0 // loop_header
    %s9 = sphi 0, %s13
    %p10 = scmp.ge.s32.totalorder %s9, 34
    %s16 = sphi 0, %s35
    %s17 = sphi 0, %s31
    %s18 = sphi 0, %s27
    %s19 = sphi 0, %s16
    %s20 = sphi 0, %s17
    %s21 = sphi 0, %s18
    %s22 = sphi 0, %s19
    %s23 = sphi 0, %s20
    %s24 = sphi 0, %s21
    %s40 = sphi 0, %s42
    %s43 = sphi 0, %s40
    %s44 = sphi 0, %s43
    %s60 = sphi 0, %s44
    %s68 = sphi 0, %s70
    %s71 = sphi 0, %s68
    %s72 = sphi 0, %s71
    %s88 = sphi 0, %s72
    %s96 = sphi 0, %s98
    %s99 = sphi 0, %s96
    %s100 = sphi 0, %s99
    %s116 = sphi 0, %s100
    %s124 = sphi 0, %s126
    %s127 = sphi 0, %s124
    %s128 = sphi 0, %s127
    %s144 = sphi 0, %s128
  $region4: #{transformer_encoder_block.4} parent=0 // loop_header_branch
    %12 = sbr.rel (%p10) target = $region8
  $region5: #{transformer_encoder_block.4} parent=0 // loop_body
    %s14 = ssub.s32 %s9, 1
    %s15 = ssub.s32 %s9, 2
    %s25 = sadd.s32 1, %s18
    %p26 = scmp.ge.s32.totalorder %s25, 2
    %s27 = scalar_select %p26, 0, %s25
    %s28 = sadd.s32 1, %s17
    %s29 = scalar_select %p26, %s28, %s17
    %p30 = scmp.ge.s32.totalorder %s29, 2
    %s31 = scalar_select %p30, 0, %s29
    %s32 = sadd.s32 1, %s16
    %s33 = scalar_select %p30, %s32, %s16
    %p34 = scmp.ge.s32.totalorder %s33, 8
    %s35 = scalar_select %p34, 0, %s33
    %s36 = ssub.s32 %s16, %s35
    %s37 = ssub.s32 %s17, %s31
    %s38 = sor.u32 %s36, %s37
    %p39 = scmp.eq.s32.totalorder %s38, 0
    %s41 = sadd.s32 %s40, 1
    %s42 = scalar_select %p39, %s40, %s41
    %p45 = pneg %p39
    %p46 = scmp.eq.s32.totalorder %s9, 31
    %p47 = por %p45, %p46
    %p48 = scmp.ne.s32.totalorder %s40, %s43
    %p49 = scmp.eq.s32.totalorder %s9, 0
    %p50 = por %p48, %p49
    %p51 = scmp.ne.s32.totalorder %s40, %s43
    %p52 = scmp.eq.s32.totalorder %s14, 31
    %p53 = por %p51, %p52
    %p54 = scmp.ne.s32.totalorder %s43, %s44
    %p55 = scmp.eq.s32.totalorder %s14, 0
    %p56 = por %p54, %p55
    %p57 = scmp.ne.s32.totalorder %s43, %s44
    %p58 = scmp.eq.s32.totalorder %s15, 31
    %p59 = por %p57, %p58
    %p61 = scmp.ne.s32.totalorder %s44, %s60
    %p62 = scmp.eq.s32.totalorder %s15, 0
    %p63 = por %p61, %p62
    %s64 = ssub.s32 %s16, %s35
    %s65 = ssub.s32 %s18, %s27
    %s66 = sor.u32 %s64, %s65
    %p67 = scmp.eq.s32.totalorder %s66, 0
    %s69 = sadd.s32 %s68, 1
    %s70 = scalar_select %p67, %s68, %s69
    %p73 = pneg %p67
    %p74 = scmp.eq.s32.totalorder %s9, 31
    %p75 = por %p73, %p74
    %p76 = scmp.ne.s32.totalorder %s68, %s71
    %p77 = scmp.eq.s32.totalorder %s9, 0
    %p78 = por %p76, %p77
    %p79 = scmp.ne.s32.totalorder %s68, %s71
    %p80 = scmp.eq.s32.totalorder %s14, 31
    %p81 = por %p79, %p80
    %p82 = scmp.ne.s32.totalorder %s71, %s72
    %p83 = scmp.eq.s32.totalorder %s14, 0
    %p84 = por %p82, %p83
    %p85 = scmp.ne.s32.totalorder %s71, %s72
    %p86 = scmp.eq.s32.totalorder %s15, 31
    %p87 = por %p85, %p86
    %p89 = scmp.ne.s32.totalorder %s72, %s88
    %p90 = scmp.eq.s32.totalorder %s15, 0
    %p91 = por %p89, %p90
    %s92 = ssub.s32 %s16, %s35
    %s93 = ssub.s32 %s18, %s27
    %s94 = sor.u32 %s92, %s93
    %p95 = scmp.eq.s32.totalorder %s94, 0
    %s97 = sadd.s32 %s96, 1
    %s98 = scalar_select %p95, %s96, %s97
    %p101 = pneg %p95
    %p102 = scmp.eq.s32.totalorder %s9, 31
    %p103 = por %p101, %p102
    %p104 = scmp.ne.s32.totalorder %s96, %s99
    %p105 = scmp.eq.s32.totalorder %s9, 0
    %p106 = por %p104, %p105
    %p107 = scmp.ne.s32.totalorder %s96, %s99
    %p108 = scmp.eq.s32.totalorder %s14, 31
    %p109 = por %p107, %p108
    %p110 = scmp.ne.s32.totalorder %s99, %s100
    %p111 = scmp.eq.s32.totalorder %s14, 0
    %p112 = por %p110, %p111
    %p113 = scmp.ne.s32.totalorder %s99, %s100
    %p114 = scmp.eq.s32.totalorder %s15, 31
    %p115 = por %p113, %p114
    %p117 = scmp.ne.s32.totalorder %s100, %s116
    %p118 = scmp.eq.s32.totalorder %s15, 0
    %p119 = por %p117, %p118
    %s120 = ssub.s32 %s16, %s35
    %s121 = ssub.s32 %s17, %s31
    %s122 = sor.u32 %s120, %s121
    %p123 = scmp.eq.s32.totalorder %s122, 0
    %s125 = sadd.s32 %s124, 1
    %s126 = scalar_select %p123, %s124, %s125
    %p129 = pneg %p123
    %p130 = scmp.eq.s32.totalorder %s9, 31
    %p131 = por %p129, %p130
    %p132 = scmp.ne.s32.totalorder %s124, %s127
    %p133 = scmp.eq.s32.totalorder %s9, 0
    %p134 = por %p132, %p133
    %p135 = scmp.ne.s32.totalorder %s124, %s127
    %p136 = scmp.eq.s32.totalorder %s14, 31
    %p137 = por %p135, %p136
    %p138 = scmp.ne.s32.totalorder %s127, %s128
    %p139 = scmp.eq.s32.totalorder %s14, 0
    %p140 = por %p138, %p139
    %p141 = scmp.ne.s32.totalorder %s127, %s128
    %p142 = scmp.eq.s32.totalorder %s15, 31
    %p143 = por %p141, %p142
    %p145 = scmp.ne.s32.totalorder %s128, %s144
    %p146 = scmp.eq.s32.totalorder %s15, 0
    %p147 = por %p145, %p146
    %p148 = scmp.le.s32.totalorder 1, %s9
    %p149 = scmp.lt.s32.totalorder %s9, 33
    %p150 = pnand %p148, %p149
    %p151 = pneg %p150
    // Predicated region
    $region9: #{transformer_encoder_block.4} parent=5 // pred_check
      _
    $region10: #{transformer_encoder_block.4} parent=5 // pred_check_branch
      %153 = sbr.rel (%p150) target = $region12
    $region11: #{transformer_encoder_block.4} parent=5 // pred_region
      %s154 = ssub.s32 %s9, 1
    $region12: #{transformer_encoder_block.4} parent=5 // pred_fallthru
      _
    %p155 = scmp.lt.s32.totalorder %s9, 32
    // Predicated region
    $region13: #{transformer_encoder_block.4} parent=5 // pred_check
      %p156 = pneg %p155
    $region14: #{transformer_encoder_block.4} parent=5 // pred_check_branch
      %158 = sbr.rel (%p156) target = $region16
    $region15: #{transformer_encoder_block.4} parent=5 // pred_region
      // Predicated region
      $region17: #{transformer_encoder_block.4} parent=15 // pred_check
        %p159 = pneg %p50
      $region18: #{transformer_encoder_block.4} parent=15 // pred_check_branch
        %161 = sbr.rel (%p159) target = $region20
      $region19: #{transformer_encoder_block.4} parent=15 // pred_region
        %p162 = scmp.lt.s32.totalorder %s16, 7
        %s163 = scalar_select %p162, %s16, 7
        %p164 = scmp.lt.s32.totalorder %s17, 1
        %s165 = scalar_select %p164, %s17, 1
        %s166 = smul.addr %s163, 2
        %s167 = sadd.s32 %s165, %s166
        %s168 = smul.addr %s167, 4
        %s169 = scalar_lea.vmem %s0, %s168
      $region20: #{transformer_encoder_block.4} parent=15 // pred_fallthru
        _
      // Predicated region
      $region21: #{transformer_encoder_block.4} parent=15 // pred_check
        %p170 = pneg %p78
      $region22: #{transformer_encoder_block.4} parent=15 // pred_check_branch
        %172 = sbr.rel (%p170) target = $region24
      $region23: #{transformer_encoder_block.4} parent=15 // pred_region
        %p173 = scmp.lt.s32.totalorder %s16, 7
        %s174 = scalar_select %p173, %s16, 7
        %p175 = scmp.lt.s32.totalorder %s18, 1
        %s176 = scalar_select %p175, %s18, 1
        %s177 = smul.addr %s174, 2
        %s178 = sadd.s32 %s176, %s177
        %s179 = smul.addr %s178, 4
        %s180 = scalar_lea.vmem %s1, %s179
      $region24: #{transformer_encoder_block.4} parent=15 // pred_fallthru
        _
      // Predicated region
      $region25: #{transformer_encoder_block.4} parent=15 // pred_check
        %p181 = pneg %p106
      $region26: #{transformer_encoder_block.4} parent=15 // pred_check_branch
        %183 = sbr.rel (%p181) target = $region28
      $region27: #{transformer_encoder_block.4} parent=15 // pred_region
        %p184 = scmp.lt.s32.totalorder %s16, 7
        %s185 = scalar_select %p184, %s16, 7
        %p186 = scmp.lt.s32.totalorder %s18, 1
        %s187 = scalar_select %p186, %s18, 1
        %s188 = smul.addr %s185, 2
        %s189 = sadd.s32 %s187, %s188
        %s190 = smul.addr %s189, 4
        %s191 = scalar_lea.vmem %s2, %s190
      $region28: #{transformer_encoder_block.4} parent=15 // pred_fallthru
        _
    $region16: #{transformer_encoder_block.4} parent=5 // pred_fallthru
      _
    %p192 = scmp.le.s32.totalorder 1, %s9
    %p193 = scmp.lt.s32.totalorder %s9, 33
    %p194 = pnand %p192, %p193
    %p195 = pneg %p194
    // Predicated region
    $region29: #{transformer_encoder_block.4} parent=5 // pred_check
      _
    $region30: #{transformer_encoder_block.4} parent=5 // pred_check_branch
      %197 = sbr.rel (%p194) target = $region32
    $region31: #{transformer_encoder_block.4} parent=5 // pred_region
      %s198 = ssub.s32 %s9, 1
      %p199 = scmp.lt.s32.totalorder %s19, 7
      %s200 = scalar_select %p199, %s19, 7
      %p201 = scmp.lt.s32.totalorder %s20, 1
      %s202 = scalar_select %p201, %s20, 1
      %s203 = smul.addr %s200, 2
      %s204 = sadd.s32 %s202, %s203
      %s205 = smul.addr %s204, 4
      %s206 = scalar_lea.vmem %s0, %s205
      %p207 = pneg %p56
      %p208 = pneg %p53
      %p209 = scmp.lt.s32.totalorder %s19, 7
      %s210 = scalar_select %p209, %s19, 7
      %p211 = scmp.lt.s32.totalorder %s21, 1
      %s212 = scalar_select %p211, %s21, 1
      %s213 = smul.addr %s210, 2
      %s214 = sadd.s32 %s212, %s213
      %s215 = smul.addr %s214, 4
      %s216 = scalar_lea.vmem %s1, %s215
      %p217 = pneg %p84
      %p218 = pneg %p81
      %p219 = scmp.lt.s32.totalorder %s19, 7
      %s220 = scalar_select %p219, %s19, 7
      %p221 = scmp.lt.s32.totalorder %s21, 1
      %s222 = scalar_select %p221, %s21, 1
      %s223 = smul.addr %s220, 2
      %s224 = sadd.s32 %s222, %s223
      %s225 = smul.addr %s224, 4
      %s226 = scalar_lea.vmem %s2, %s225
      %p227 = pneg %p112
      %p228 = pneg %p109
      %p229 = pneg %p140
      %p230 = pneg %p137
      %p231 = scmp.lt.s32.totalorder %s19, 7
      %s232 = scalar_select %p231, %s19, 7
      %p233 = scmp.lt.s32.totalorder %s20, 1
      %s234 = scalar_select %p233, %s20, 1
      %s235 = smul.addr %s232, 2
      %s236 = sadd.s32 %s234, %s235
      %s237 = smul.addr %s236, 4
      %s238 = scalar_lea.vmem %s3, %s237
      %p239 = scmp.lt.s32.totalorder %s19, 7
      %s240 = scalar_select %p239, %s19, 7
      %p241 = scmp.lt.s32.totalorder %s20, 1
      %s242 = scalar_select %p241, %s20, 1
      %s243 = smul.addr %s240, 2
      %s244 = sadd.s32 %s242, %s243
      %s245 = smul.addr %s244, 4
      %s246 = scalar_lea.vmem %s0, %s245
      %p247 = scmp.lt.s32.totalorder %s19, 7
      %s248 = scalar_select %p247, %s19, 7
      %p249 = scmp.lt.s32.totalorder %s21, 1
      %s250 = scalar_select %p249, %s21, 1
      %s251 = smul.addr %s248, 2
      %s252 = sadd.s32 %s250, %s251
      %s253 = smul.addr %s252, 4
      %s254 = scalar_lea.vmem %s1, %s253
      %p255 = scmp.lt.s32.totalorder %s19, 7
      %s256 = scalar_select %p255, %s19, 7
      %p257 = scmp.lt.s32.totalorder %s21, 1
      %s258 = scalar_select %p257, %s21, 1
      %s259 = smul.addr %s256, 2
      %s260 = sadd.s32 %s258, %s259
      %s261 = smul.addr %s260, 4
      %s262 = scalar_lea.vmem %s2, %s261
      %p263 = scmp.lt.s32.totalorder %s19, 7
      %s264 = scalar_select %p263, %s19, 7
      %p265 = scmp.lt.s32.totalorder %s20, 1
      %s266 = scalar_select %p265, %s20, 1
      %s267 = smul.addr %s264, 2
      %s268 = sadd.s32 %s266, %s267
      %s269 = smul.addr %s268, 4
      %s270 = scalar_lea.vmem %s3, %s269
      %p272 = scmp.eq.s32.totalorder %s21, 0
      // Predicated region
      $region33: #{transformer_encoder_block.4} parent=31 // pred_check
        %p273 = pneg %p272
      $region34: #{transformer_encoder_block.4} parent=31 // pred_check_branch
        %275 = sbr.rel (%p273) target = $region36
      $region35: #{transformer_encoder_block.4} parent=31 // pred_region
        %vm276 = vcmask 7168
        %277 = vst.msk [vmem:[#allocation2] sm:$0xff] %vm276, -inf
        %278 = vst.msk [vmem:[#allocation3] sm:$0xff] %vm276, 0.0
        %vm279 = vcmask 64512
        %280 = vst.msk [vmem:[#allocation4] sm:$0xff] %vm279, 0.0
      $region36: #{transformer_encoder_block.4} parent=31 // pred_fallthru
        _
      %v281 = vld [vmem:[%s246] sm:$0xf]
      %v282 = vld [vmem:[%s254] sm:$0xf]
      %vm283 = vcmask 64512
      %v285 = vsel %vm283, %v281, 0
      %v288 = vsel %vm283, %v282, 0
      %290 = vmatprep.subr.bf16.mxu0 0
      %291 = vmatpush1.bf16.xpose.msra.mxu0 %v288
      %292 = vmatprep.subr.bf16.mxu0 0
      %293 = vmatpush1.bf16.xpose.msra.mxu0 0
      %294 = vmatprep.subr.bf16.mxu0 0
      %295 = vmatpush1.bf16.xpose.msra.mxu0 0
      %296 = vmatprep.subr.bf16.mxu0 0
      %297 = vmatpush1.bf16.xpose.msra.mxu0 0
      %298 = vmatprep.subr.bf16.mxu0 0
      %299 = vmatpush1.bf16.xpose.msra.mxu0 0
      %300 = vmatprep.subr.bf16.mxu0 0
      %301 = vmatpush1.bf16.xpose.msra.mxu0 0
      %302 = vmatprep.subr.bf16.mxu0 0
      %303 = vmatpush1.bf16.xpose.msra.mxu0 0
      %304 = vmatprep.subr.bf16.mxu0 0
      %305 = vmatpush1.bf16.xpose.msra.mxu0 0
      %306 = vmatprep.subr.bf16.mxu0 0
      %307 = vmatpush1.bf16.xpose.msra.mxu0 0
      %308 = vmatprep.subr.bf16.mxu0 0
      %309 = vmatpush1.bf16.xpose.msra.mxu0 0
      %310 = vmatprep.subr.bf16.mxu0 0
      %311 = vmatpush1.bf16.xpose.msra.mxu0 0
      %312 = vmatprep.subr.bf16.mxu0 0
      %313 = vmatpush1.bf16.xpose.msra.mxu0 0
      %314 = vmatprep.subr.bf16.mxu0 0
      %315 = vmatpush1.bf16.xpose.msra.mxu0 0
      %316 = vmatprep.subr.bf16.mxu0 0
      %317 = vmatpush1.bf16.xpose.msra.mxu0 0
      %318 = vmatprep.subr.bf16.mxu0 0
      %319 = vmatpush1.bf16.xpose.msra.mxu0 0
      %320 = vmatprep.subr.bf16.mxu0 0
      %321 = vmatpush1.bf16.xpose.msra.mxu0 0
      %322 = vmatprep.mubr.bf16.mxu0 0
      %323 = vmatmul.mubr.bf16.gmra.mrb[0].mxu0 %v285
      %v324 = vpop.f32.mrb[0].mxu0
      %v325 = vadd.f32 0.0, %v324
      %v326 = vpop.f32.mrb[0].mxu0
      %v327 = vpop.f32.mrb[0].mxu0
      %v328 = vpop.f32.mrb[0].mxu0
      %329 = vdwg.mxu0
      %v330 = vld [vmem:[#allocation2] sm:$0xff]
      %v331 = vsel %vm283, %v325, -inf
      %332 = vmax.xlane.f32.xlu0 %v331
      %v333 = vpop.xlane.xlu0 %332
      %v334 = vmax.f32 %v330, %v333
      %v335 = vsub.f32 %v330, %v334
      %v336 = vmul.f32 %v335, 1.442695
      %v337 = vpow.pop %v336
      %339 = vset.pattern.permute.xlu0 0
      %340 = vperm.xlu0 %339, %v334
      %v341 = vpop.permute.xlu0 %340
      %v343 = vsub.f32 %v325, %v341
      %v344 = vmul.f32 %v343, 1.442695
      %v345 = vpow.pop %v344
      %v346 = vld [vmem:[#allocation3] sm:$0xff]
      %v347 = vmul.f32 %v337, %v346
      %v348 = vsel %vm283, %v345, 0.0
      %349 = vadd.xlane.f32.xlu0 %v348
      %v350 = vpop.xlane.xlu0 %349
      %v351 = vadd.f32 %v347, %v350
      %vm352 = vcmask 7168
      %353 = vst.msk [vmem:[#allocation3] sm:$0xff] %vm352, %v351
      %v354 = vld [vmem:[#allocation4] sm:$0xff]
      %356 = vset.pattern.permute.xlu0 0
      %357 = vperm.xlu0 %356, %v337
      %v358 = vpop.permute.xlu0 %357
      %v360 = vmul.f32 %v358, %v354
      %v361 = vpack.c.bf16 %v345, %v345
      %v362 = vld [vmem:[%s262] sm:$0xf]
      %v364 = vsel %vm283, %v361, 0
      %vm366 = vcmask 1043456
      %v368 = vsel %vm366, %v362, 0
      %370 = vmatprep.subr.bf16.mxu0 0
      %371 = vmatpush1.bf16.msra.mxu0 %v368
      %372 = vmatprep.subr.bf16.mxu0 0
      %373 = vmatpush1.bf16.msra.mxu0 0
      %374 = vmatprep.subr.bf16.mxu0 0
      %375 = vmatpush1.bf16.msra.mxu0 0
      %376 = vmatprep.subr.bf16.mxu0 0
      %377 = vmatpush1.bf16.msra.mxu0 0
      %378 = vmatprep.subr.bf16.mxu0 0
      %379 = vmatpush1.bf16.msra.mxu0 0
      %380 = vmatprep.subr.bf16.mxu0 0
      %381 = vmatpush1.bf16.msra.mxu0 0
      %382 = vmatprep.subr.bf16.mxu0 0
      %383 = vmatpush1.bf16.msra.mxu0 0
      %384 = vmatprep.subr.bf16.mxu0 0
      %385 = vmatpush1.bf16.msra.mxu0 0
      %386 = vmatprep.subr.bf16.mxu0 0
      %387 = vmatpush1.bf16.msra.mxu0 0
      %388 = vmatprep.subr.bf16.mxu0 0
      %389 = vmatpush1.bf16.msra.mxu0 0
      %390 = vmatprep.subr.bf16.mxu0 0
      %391 = vmatpush1.bf16.msra.mxu0 0
      %392 = vmatprep.subr.bf16.mxu0 0
      %393 = vmatpush1.bf16.msra.mxu0 0
      %394 = vmatprep.subr.bf16.mxu0 0
      %395 = vmatpush1.bf16.msra.mxu0 0
      %396 = vmatprep.subr.bf16.mxu0 0
      %397 = vmatpush1.bf16.msra.mxu0 0
      %398 = vmatprep.subr.bf16.mxu0 0
      %399 = vmatpush1.bf16.msra.mxu0 0
      %400 = vmatprep.subr.bf16.mxu0 0
      %401 = vmatpush1.bf16.msra.mxu0 0
      %402 = vmatprep.mubr.bf16.mxu0 0
      %403 = vmatmul.mubr.bf16.gmra.mrb[0].mxu0 %v364
      %v404 = vpop.f32.mrb[0].mxu0
      %v405 = vadd.f32 0.0, %v404
      %v406 = vpop.f32.mrb[0].mxu0
      %v407 = vpop.f32.mrb[0].mxu0
      %v408 = vpop.f32.mrb[0].mxu0
      %409 = vdwg.mxu0
      %v410 = vadd.f32 %v360, %v405
      %411 = vst.msk [vmem:[#allocation4] sm:$0xff] %vm283, %v410
      %412 = vst.msk [vmem:[#allocation2] sm:$0xff] %vm352, %v334
      %p413 = scmp.eq.s32.totalorder %s21, 1
      // Predicated region
      $region37: #{transformer_encoder_block.4} parent=31 // pred_check
        %p414 = pneg %p413
      $region38: #{transformer_encoder_block.4} parent=31 // pred_check_branch
        %416 = sbr.rel (%p414) target = $region40
      $region39: #{transformer_encoder_block.4} parent=31 // pred_region
        %v417 = vld [vmem:[#allocation3] sm:$0xff]
        %v418 = vrcp.pop %v417
        %v419 = vld [vmem:[#allocation4] sm:$0xff]
        %421 = vset.pattern.permute.xlu0 0
        %422 = vperm.xlu0 %421, %v418
        %v423 = vpop.permute.xlu0 %422
        %v425 = vmul.f32 %v419, %v423
        %v426 = vpack.c.bf16 %v425, %v425
        %vm427 = vcmask 60416
        %428 = vst.msk [vmem:[%s270] sm:$0xf] %vm427, %v426
      $region40: #{transformer_encoder_block.4} parent=31 // pred_fallthru
        _
      %p429 = scmp.lt.s32.totalorder %s19, 7
      %s430 = scalar_select %p429, %s19, 7
      %p431 = scmp.lt.s32.totalorder %s20, 1
      %s432 = scalar_select %p431, %s20, 1
      %s433 = smul.addr %s430, 2
      %s434 = sadd.s32 %s432, %s433
      %s435 = smul.addr %s434, 4
      %s436 = scalar_lea.vmem %s3, %s435
      // Predicated region
      $region41: #{transformer_encoder_block.4} parent=31 // pred_check
        %p437 = pneg %p137
      $region42: #{transformer_encoder_block.4} parent=31 // pred_check_branch
        %439 = sbr.rel (%p437) target = $region44
      $region43: #{transformer_encoder_block.4} parent=31 // pred_region
        _
      $region44: #{transformer_encoder_block.4} parent=31 // pred_fallthru
        _
    $region32: #{transformer_encoder_block.4} parent=5 // pred_fallthru
      _
    %p440 = scmp.le.s32.totalorder 2, %s9
    // Predicated region
    $region45: #{transformer_encoder_block.4} parent=5 // pred_check
      %p441 = pneg %p440
    $region46: #{transformer_encoder_block.4} parent=5 // pred_check_branch
      %443 = sbr.rel (%p441) target = $region48
    $region47: #{transformer_encoder_block.4} parent=5 // pred_region
      %s444 = ssub.s32 %s9, 2
      // Predicated region
      $region49: #{transformer_encoder_block.4} parent=47 // pred_check
        %p445 = pneg %p143
      $region50: #{transformer_encoder_block.4} parent=47 // pred_check_branch
        %447 = sbr.rel (%p445) target = $region52
      $region51: #{transformer_encoder_block.4} parent=47 // pred_region
        %p448 = scmp.lt.s32.totalorder %s22, 7
        %s449 = scalar_select %p448, %s22, 7
        %p450 = scmp.lt.s32.totalorder %s23, 1
        %s451 = scalar_select %p450, %s23, 1
        %s452 = smul.addr %s449, 2
        %s453 = sadd.s32 %s451, %s452
        %s454 = smul.addr %s453, 4
        %s455 = scalar_lea.vmem %s3, %s454
      $region52: #{transformer_encoder_block.4} parent=47 // pred_fallthru
        _
    $region48: #{transformer_encoder_block.4} parent=5 // pred_fallthru
      _
  $region6: #{transformer_encoder_block.4} parent=0 // loop_footer
    %s13 = sadd.s32 1, %s9
  $region7: #{transformer_encoder_block.4} parent=0 // loop_footer_branch
    %8 = sbr.rel target = $region3
  $region8: #{transformer_encoder_block.4} parent=0 // loop_exit
    _

// kernel: transformer_encoder_block.3
$region0: #{transformer_encoder_block.3}
  #allocation0 [shape = 'u32[]', space=smem, size = 0x4, offset = 0x4, fixed_abs, tag = 'smem constant byte address 0x4 - core index']
  #allocation1 [shape = 'u32[144,128]{1,0:T(1,128)}', space=vmem, size = 0x12000, scoped, tag = 'internal scratch']
  %s0 = inlined_call_operand.hbm [shape: f32[32,32], index: 0, kind: input, shape index: {}]
  %s1 = inlined_call_operand.vmem [shape: f32[1,32], index: 1, kind: input, shape index: {}]
  %s2 = inlined_call_operand.vmem [shape: f32[1,32], index: 2, kind: input, shape index: {}]
  %s3 = inlined_call_operand.hbm [shape: bf16[32,96], index: 3, kind: input, shape index: {}]
  %s4 = inlined_call_operand.vmem [shape: f32[1,96], index: 4, kind: input, shape index: {}]
  %s5 = inlined_call_operand.vmem [shape: bf16[32,32], index: 5, kind: output, shape index: {0}]
  %s6 = inlined_call_operand.vmem [shape: bf16[32,32], index: 6, kind: output, shape index: {1}]
  %s7 = inlined_call_operand.vmem [shape: bf16[32,32], index: 7, kind: output, shape index: {2}]
  %8 = xla_tuple %s5, %s6, %s7
  %s9 = sld [smem:[#allocation0]]
  $region77: #{transformer_encoder_block.3} parent=0
    _
  %s11 = ssub.s32 1, %s9
  %s12 = scalar_select 0, %s11, %s9
  $region1: #{transformer_encoder_block.3} parent=0
    #allocation2 [shape = 'u8[8192]{0}', space=vmem, size = 0x2000, scoped, tag = 'input window, operand 0']
    #allocation3 [shape = 's32[2]{0}', space=sflag, size = 0x8, scoped, tag = 'scoped memory for transformer_encoder_block.3']
    #allocation4 [shape = 'u8[8192]{0}', space=vmem, size = 0x2000, scoped, tag = 'input window, operand 3, single buffered']
    #allocation5 [shape = 's32[1]{0}', space=sflag, size = 0x4, scoped, tag = 'scoped memory for transformer_encoder_block.3']
    %13 = vsyncpa [#allocation3], 0
    %s14 = scalar_lea.sflag [#allocation3], 1
    %15 = vsyncpa %s14, 0
    %16 = vsyncpa [#allocation5], 0
    loop: start=0, step=1, limit=6
    $region2: #{transformer_encoder_block.3} parent=1 // loop_pre_header
      _
    $region3: #{transformer_encoder_block.3} parent=1 // loop_header
      %s18 = sphi 0, %s22
      %p19 = scmp.ge.s32.totalorder %s18, 6
      %s28 = sphi 0, %s30
      %s31 = sphi 0, %s28
      %s32 = sphi 0, %s31
      %s48 = sphi 0, %s32
      %s52 = sphi 0, %s52
      %s54 = sphi 0, %s52
      %s55 = sphi 0, %s54
      %s69 = sphi 0, %s55
      %s73 = sphi 0, %s73
      %s75 = sphi 0, %s73
      %s76 = sphi 0, %s75
      %s90 = sphi 0, %s76
      %s94 = sphi 0, %s94
      %s96 = sphi 0, %s94
      %s97 = sphi 0, %s96
      %s111 = sphi 0, %s97
      %s115 = sphi 0, %s115
      %s117 = sphi 0, %s115
      %s118 = sphi 0, %s117
      %s132 = sphi 0, %s118
      %s138 = sphi 0, %s140
      %s141 = sphi 0, %s138
      %s142 = sphi 0, %s141
      %s158 = sphi 0, %s142
      %s164 = sphi 0, %s166
      %s167 = sphi 0, %s164
      %s168 = sphi 0, %s167
      %s184 = sphi 0, %s168
      %s190 = sphi 0, %s192
      %s193 = sphi 0, %s190
      %s194 = sphi 0, %s193
      %s210 = sphi 0, %s194
    $region4: #{transformer_encoder_block.3} parent=1 // loop_header_branch
      %21 = sbr.rel (%p19) target = $region8
    $region5: #{transformer_encoder_block.3} parent=1 // loop_body
      %s23 = ssub.s32 %s18, 1
      %s24 = ssub.s32 %s18, 2
      %s25 = sadd.s32 %s18, 1
      %s26 = ssub.s32 %s18, %s25
      %p27 = scmp.eq.s32.totalorder %s26, 0
      %s29 = sadd.s32 %s28, 1
      %s30 = scalar_select %p27, %s28, %s29
      %p33 = pneg %p27
      %p34 = scmp.eq.s32.totalorder %s18, 3
      %p35 = por %p33, %p34
      %p36 = scmp.ne.s32.totalorder %s28, %s31
      %p37 = scmp.eq.s32.totalorder %s18, 0
      %p38 = por %p36, %p37
      %p39 = scmp.ne.s32.totalorder %s28, %s31
      %p40 = scmp.eq.s32.totalorder %s23, 3
      %p41 = por %p39, %p40
      %p42 = scmp.ne.s32.totalorder %s31, %s32
      %p43 = scmp.eq.s32.totalorder %s23, 0
      %p44 = por %p42, %p43
      %p45 = scmp.ne.s32.totalorder %s31, %s32
      %p46 = scmp.eq.s32.totalorder %s24, 3
      %p47 = por %p45, %p46
      %p49 = scmp.ne.s32.totalorder %s32, %s48
      %p50 = scmp.eq.s32.totalorder %s24, 0
      %p51 = por %p49, %p50
      %s53 = sadd.s32 %s52, 1
      %p56 = scmp.eq.s32.totalorder %s18, 3
      %p57 = scmp.ne.s32.totalorder %s52, %s54
      %p58 = scmp.eq.s32.totalorder %s18, 0
      %p59 = por %p57, %p58
      %p60 = scmp.ne.s32.totalorder %s52, %s54
      %p61 = scmp.eq.s32.totalorder %s23, 3
      %p62 = por %p60, %p61
      %p63 = scmp.ne.s32.totalorder %s54, %s55
      %p64 = scmp.eq.s32.totalorder %s23, 0
      %p65 = por %p63, %p64
      %p66 = scmp.ne.s32.totalorder %s54, %s55
      %p67 = scmp.eq.s32.totalorder %s24, 3
      %p68 = por %p66, %p67
      %p70 = scmp.ne.s32.totalorder %s55, %s69
      %p71 = scmp.eq.s32.totalorder %s24, 0
      %p72 = por %p70, %p71
      %s74 = sadd.s32 %s73, 1
      %p77 = scmp.eq.s32.totalorder %s18, 3
      %p78 = scmp.ne.s32.totalorder %s73, %s75
      %p79 = scmp.eq.s32.totalorder %s18, 0
      %p80 = por %p78, %p79
      %p81 = scmp.ne.s32.totalorder %s73, %s75
      %p82 = scmp.eq.s32.totalorder %s23, 3
      %p83 = por %p81, %p82
      %p84 = scmp.ne.s32.totalorder %s75, %s76
      %p85 = scmp.eq.s32.totalorder %s23, 0
      %p86 = por %p84, %p85
      %p87 = scmp.ne.s32.totalorder %s75, %s76
      %p88 = scmp.eq.s32.totalorder %s24, 3
      %p89 = por %p87, %p88
      %p91 = scmp.ne.s32.totalorder %s76, %s90
      %p92 = scmp.eq.s32.totalorder %s24, 0
      %p93 = por %p91, %p92
      %s95 = sadd.s32 %s94, 1
      %p98 = scmp.eq.s32.totalorder %s18, 3
      %p99 = scmp.ne.s32.totalorder %s94, %s96
      %p100 = scmp.eq.s32.totalorder %s18, 0
      %p101 = por %p99, %p100
      %p102 = scmp.ne.s32.totalorder %s94, %s96
      %p103 = scmp.eq.s32.totalorder %s23, 3
      %p104 = por %p102, %p103
      %p105 = scmp.ne.s32.totalorder %s96, %s97
      %p106 = scmp.eq.s32.totalorder %s23, 0
      %p107 = por %p105, %p106
      %p108 = scmp.ne.s32.totalorder %s96, %s97
      %p109 = scmp.eq.s32.totalorder %s24, 3
      %p110 = por %p108, %p109
      %p112 = scmp.ne.s32.totalorder %s97, %s111
      %p113 = scmp.eq.s32.totalorder %s24, 0
      %p114 = por %p112, %p113
      %s116 = sadd.s32 %s115, 1
      %p119 = scmp.eq.s32.totalorder %s18, 3
      %p120 = scmp.ne.s32.totalorder %s115, %s117
      %p121 = scmp.eq.s32.totalorder %s18, 0
      %p122 = por %p120, %p121
      %p123 = scmp.ne.s32.totalorder %s115, %s117
      %p124 = scmp.eq.s32.totalorder %s23, 3
      %p125 = por %p123, %p124
      %p126 = scmp.ne.s32.totalorder %s117, %s118
      %p127 = scmp.eq.s32.totalorder %s23, 0
      %p128 = por %p126, %p127
      %p129 = scmp.ne.s32.totalorder %s117, %s118
      %p130 = scmp.eq.s32.totalorder %s24, 3
      %p131 = por %p129, %p130
      %p133 = scmp.ne.s32.totalorder %s118, %s132
      %p134 = scmp.eq.s32.totalorder %s24, 0
      %p135 = por %p133, %p134
      %s136 = ssub.s32 %s18, %s25
      %p137 = scmp.eq.s32.totalorder %s136, 0
      %s139 = sadd.s32 %s138, 1
      %s140 = scalar_select %p137, %s138, %s139
      %p143 = pneg %p137
      %p144 = scmp.eq.s32.totalorder %s18, 3
      %p145 = por %p143, %p144
      %p146 = scmp.ne.s32.totalorder %s138, %s141
      %p147 = scmp.eq.s32.totalorder %s18, 0
      %p148 = por %p146, %p147
      %p149 = scmp.ne.s32.totalorder %s138, %s141
      %p150 = scmp.eq.s32.totalorder %s23, 3
      %p151 = por %p149, %p150
      %p152 = scmp.ne.s32.totalorder %s141, %s142
      %p153 = scmp.eq.s32.totalorder %s23, 0
      %p154 = por %p152, %p153
      %p155 = scmp.ne.s32.totalorder %s141, %s142
      %p156 = scmp.eq.s32.totalorder %s24, 3
      %p157 = por %p155, %p156
      %p159 = scmp.ne.s32.totalorder %s142, %s158
      %p160 = scmp.eq.s32.totalorder %s24, 0
      %p161 = por %p159, %p160
      %s162 = ssub.s32 %s18, %s25
      %p163 = scmp.eq.s32.totalorder %s162, 0
      %s165 = sadd.s32 %s164, 1
      %s166 = scalar_select %p163, %s164, %s165
      %p169 = pneg %p163
      %p170 = scmp.eq.s32.totalorder %s18, 3
      %p171 = por %p169, %p170
      %p172 = scmp.ne.s32.totalorder %s164, %s167
      %p173 = scmp.eq.s32.totalorder %s18, 0
      %p174 = por %p172, %p173
      %p175 = scmp.ne.s32.totalorder %s164, %s167
      %p176 = scmp.eq.s32.totalorder %s23, 3
      %p177 = por %p175, %p176
      %p178 = scmp.ne.s32.totalorder %s167, %s168
      %p179 = scmp.eq.s32.totalorder %s23, 0
      %p180 = por %p178, %p179
      %p181 = scmp.ne.s32.totalorder %s167, %s168
      %p182 = scmp.eq.s32.totalorder %s24, 3
      %p183 = por %p181, %p182
      %p185 = scmp.ne.s32.totalorder %s168, %s184
      %p186 = scmp.eq.s32.totalorder %s24, 0
      %p187 = por %p185, %p186
      %s188 = ssub.s32 %s18, %s25
      %p189 = scmp.eq.s32.totalorder %s188, 0
      %s191 = sadd.s32 %s190, 1
      %s192 = scalar_select %p189, %s190, %s191
      %p195 = pneg %p189
      %p196 = scmp.eq.s32.totalorder %s18, 3
      %p197 = por %p195, %p196
      %p198 = scmp.ne.s32.totalorder %s190, %s193
      %p199 = scmp.eq.s32.totalorder %s18, 0
      %p200 = por %p198, %p199
      %p201 = scmp.ne.s32.totalorder %s190, %s193
      %p202 = scmp.eq.s32.totalorder %s23, 3
      %p203 = por %p201, %p202
      %p204 = scmp.ne.s32.totalorder %s193, %s194
      %p205 = scmp.eq.s32.totalorder %s23, 0
      %p206 = por %p204, %p205
      %p207 = scmp.ne.s32.totalorder %s193, %s194
      %p208 = scmp.eq.s32.totalorder %s24, 3
      %p209 = por %p207, %p208
      %p211 = scmp.ne.s32.totalorder %s194, %s210
      %p212 = scmp.eq.s32.totalorder %s24, 0
      %p213 = por %p211, %p212
      %p214 = scmp.le.s32.totalorder 1, %s18
      %p215 = scmp.lt.s32.totalorder %s18, 5
      %p216 = pnand %p214, %p215
      %p217 = pneg %p216
      // Predicated region
      $region9: #{transformer_encoder_block.3} parent=5 // pred_check
        _
      $region10: #{transformer_encoder_block.3} parent=5 // pred_check_branch
        %219 = sbr.rel (%p216) target = $region12
      $region11: #{transformer_encoder_block.3} parent=5 // pred_region
        %s220 = ssub.s32 %s18, 1
        // Predicated region
        $region13: #{transformer_encoder_block.3} parent=11 // pred_check
          %p221 = pneg %p65
        $region14: #{transformer_encoder_block.3} parent=11 // pred_check_branch
          %223 = sbr.rel (%p221) target = $region16
        $region15: #{transformer_encoder_block.3} parent=11 // pred_region
          _
        $region16: #{transformer_encoder_block.3} parent=11 // pred_fallthru
          _
        // Predicated region
        $region17: #{transformer_encoder_block.3} parent=11 // pred_check
          %p224 = pneg %p86
        $region18: #{transformer_encoder_block.3} parent=11 // pred_check_branch
          %226 = sbr.rel (%p224) target = $region20
        $region19: #{transformer_encoder_block.3} parent=11 // pred_region
          _
        $region20: #{transformer_encoder_block.3} parent=11 // pred_fallthru
          _
        // Predicated region
        $region21: #{transformer_encoder_block.3} parent=11 // pred_check
          %p227 = pneg %p107
        $region22: #{transformer_encoder_block.3} parent=11 // pred_check_branch
          %229 = sbr.rel (%p227) target = $region24
        $region23: #{transformer_encoder_block.3} parent=11 // pred_region
          %s231 = ssub.s32 256, 256
          %232 = vsyncadd [#allocation5], %s231
          %s233 = sshll.u32 [#allocation4], 4
          %s234 = int_to_ptr.vmem [resolvable:$true] %s233
          %239 = dma.hbm_to_vmem [thread:$0]  %s3, 256, %s234, [#allocation5], 64, 64, 4
        $region24: #{transformer_encoder_block.3} parent=11 // pred_fallthru
          _
        // Predicated region
        $region25: #{transformer_encoder_block.3} parent=11 // pred_check
          %p240 = pneg %p128
        $region26: #{transformer_encoder_block.3} parent=11 // pred_check_branch
          %242 = sbr.rel (%p240) target = $region28
        $region27: #{transformer_encoder_block.3} parent=11 // pred_region
          _
        $region28: #{transformer_encoder_block.3} parent=11 // pred_fallthru
          _
      $region12: #{transformer_encoder_block.3} parent=5 // pred_fallthru
        _
      %p243 = scmp.lt.s32.totalorder %s18, 4
      // Predicated region
      $region29: #{transformer_encoder_block.3} parent=5 // pred_check
        %p244 = pneg %p243
      $region30: #{transformer_encoder_block.3} parent=5 // pred_check_branch
        %246 = sbr.rel (%p244) target = $region32
      $region31: #{transformer_encoder_block.3} parent=5 // pred_region
        // Predicated region
        $region33: #{transformer_encoder_block.3} parent=31 // pred_check
          %p247 = pneg %p38
        $region34: #{transformer_encoder_block.3} parent=31 // pred_check_branch
          %249 = sbr.rel (%p247) target = $region36
        $region35: #{transformer_encoder_block.3} parent=31 // pred_region
          %s250 = sand.u32 %s28, 1
          %s251 = scalar_lea.sflag [#allocation3], %s250
          %s252 = sand.u32 %s28, 1
          %s253 = smul.addr %s252, 8
          %s254 = scalar_lea.vmem [#allocation2], %s253
          %s256 = ssub.s32 128, 128
          %257 = vsyncadd %s251, %s256
          %s258 = smul.addr %s18, 128
          %s259 = scalar_lea.hbm %s0, %s258
          %s261 = sshll.u32 %s254, 4
          %s262 = int_to_ptr.vmem [resolvable:$true] %s261
          %264 = dma.hbm_to_vmem [thread:$0]  %s259, 128, %s262, %s251
        $region36: #{transformer_encoder_block.3} parent=31 // pred_fallthru
          _
      $region32: #{transformer_encoder_block.3} parent=5 // pred_fallthru
        _
      %p265 = scmp.le.s32.totalorder 1, %s18
      %p266 = scmp.lt.s32.totalorder %s18, 5
      %p267 = pnand %p265, %p266
      %p268 = pneg %p267
      // Predicated region
      $region37: #{transformer_encoder_block.3} parent=5 // pred_check
        _
      $region38: #{transformer_encoder_block.3} parent=5 // pred_check_branch
        %270 = sbr.rel (%p267) target = $region40
      $region39: #{transformer_encoder_block.3} parent=5 // pred_region
        %s271 = ssub.s32 %s18, 1
        %s272 = sand.u32 %s31, 1
        %s273 = scalar_lea.sflag [#allocation3], %s272
        %s274 = sand.u32 %s31, 1
        %s275 = smul.addr %s274, 8
        %s276 = scalar_lea.vmem [#allocation2], %s275
        // Predicated region
        $region41: #{transformer_encoder_block.3} parent=39 // pred_check
          %p277 = pneg %p44
        $region42: #{transformer_encoder_block.3} parent=39 // pred_check_branch
          %279 = sbr.rel (%p277) target = $region44
        $region43: #{transformer_encoder_block.3} parent=39 // pred_region
          %280 = dma.done %s273, 128
        $region44: #{transformer_encoder_block.3} parent=39 // pred_fallthru
          _
        // Predicated region
        $region45: #{transformer_encoder_block.3} parent=39 // pred_check
          %p281 = pneg %p107
        $region46: #{transformer_encoder_block.3} parent=39 // pred_check_branch
          %283 = sbr.rel (%p281) target = $region48
        $region47: #{transformer_encoder_block.3} parent=39 // pred_region
          %284 = dma.done [#allocation5], 256
        $region48: #{transformer_encoder_block.3} parent=39 // pred_fallthru
          _
        %s285 = sand.u32 %s31, 1
        %s286 = scalar_lea.sflag [#allocation3], %s285
        %s287 = sand.u32 %s31, 1
        %s288 = smul.addr %s287, 8
        %s289 = scalar_lea.vmem [#allocation2], %s288
        %p290 = pneg %p44
        %p291 = pneg %p41
        %p292 = pneg %p65
        %p293 = pneg %p62
        %p294 = pneg %p86
        %p295 = pneg %p83
        %p296 = pneg %p107
        %p297 = pneg %p104
        %p298 = pneg %p128
        %p299 = pneg %p125
        %p300 = pneg %p154
        %p301 = pneg %p151
        %p302 = scmp.lt.s32.totalorder %s23, 3
        %s303 = scalar_select %p302, %s23, 3
        %s304 = smul.addr %s303, 4
        %s305 = scalar_lea.vmem %s5, %s304
        %p306 = pneg %p180
        %p307 = pneg %p177
        %p308 = scmp.lt.s32.totalorder %s23, 3
        %s309 = scalar_select %p308, %s23, 3
        %s310 = smul.addr %s309, 4
        %s311 = scalar_lea.vmem %s6, %s310
        %p312 = pneg %p206
        %p313 = pneg %p203
        %p314 = scmp.lt.s32.totalorder %s23, 3
        %s315 = scalar_select %p314, %s23, 3
        %s316 = smul.addr %s315, 4
        %s317 = scalar_lea.vmem %s7, %s316
        %p318 = scmp.lt.s32.totalorder %s23, 3
        %s319 = scalar_select %p318, %s23, 3
        %s320 = smul.addr %s319, 4
        %s321 = scalar_lea.vmem %s5, %s320
        %p322 = scmp.lt.s32.totalorder %s23, 3
        %s323 = scalar_select %p322, %s23, 3
        %s324 = smul.addr %s323, 4
        %s325 = scalar_lea.vmem %s6, %s324
        %p326 = scmp.lt.s32.totalorder %s23, 3
        %s327 = scalar_select %p326, %s23, 3
        %s328 = smul.addr %s327, 4
        %s329 = scalar_lea.vmem %s7, %s328
        %v331 = vld [vmem:[%s276] sm:$0xff]
        %vm332 = vcmask 261120
        %v333 = vsel %vm332, %v331, 0.0
        %334 = vadd.xlane.f32.xlu0 %v333
        %v335 = vpop.xlane.xlu0 %334
        %v336 = vrcp.pop 32.0
        %v337 = vmul.f32 %v335, %v336
        %v338 = vsub.f32 %v331, %v337
        %v339 = vmul.f32 %v338, %v338
        %v340 = vsel %vm332, %v339, 0.0
        %341 = vadd.xlane.f32.xlu0 %v340
        %v342 = vpop.xlane.xlu0 %341
        %v343 = vmul.f32 %v342, %v336
        %v344 = vadd.f32 %v343, 1e-05
        %v345 = vrsqrt.pop %v344
        %v346 = vmul.f32 %v338, %v345
        %v347 = vld [vmem:[%s1] sm:$0x1]
        %v349 = vlaneseq
        %v350 = vshrl.u32 %v349, 7
        %v351 = vsub.s32 0, %v350
        %v352 = vrot.slane %v347, %v351
        %v354 = vmul.f32 %v346, %v352
        %v355 = vld [vmem:[%s2] sm:$0x1]
        %v357 = vlaneseq
        %v358 = vshrl.u32 %v357, 7
        %v359 = vsub.s32 0, %v358
        %v360 = vrot.slane %v355, %v359
        %v362 = vadd.f32 %v354, %v360
        %v363 = vpack.c.bf16 %v362, %v362
        %v364 = vld [vmem:[#allocation4] sm:$0xf]
        %v365 = vld [vmem:[#allocation4 + $0x4] sm:$0xf]
        %v366 = vld [vmem:[#allocation4 + $0x8] sm:$0xf]
        %v367 = vld [vmem:[#allocation4 + $0xc] sm:$0xf]
        %v368 = vld [vmem:[%s4] sm:$0x1]
        %v370 = vlaneseq
        %v371 = vshrl.u32 %v370, 7
        %v372 = vsub.s32 0, %v371
        %v373 = vrot.slane %v368, %v372
        %v379 = vunpack.c.l.b16 %v364
        %v380 = vunpack.c.l.b16 %v365
        %v381 = vunpack.c.l.b16 %v366
        %v382 = vunpack.c.l.b16 %v367
        %v383 = vpack.c.b16 %v380, %v379
        %v384 = vpack.c.b16 %v382, %v381
        %v388 = vsel %vm332, %v363, 0
        %390 = vmatprep.subr.bf16.mxu0 0
        %391 = vmatpush1.bf16.msra.mxu0 %v383
        %392 = vmatprep.subr.bf16.mxu0 0
        %393 = vmatpush1.bf16.msra.mxu0 %v384
        %394 = vmatprep.subr.bf16.mxu0 0
        %395 = vmatpush1.bf16.msra.mxu0 0
        %396 = vmatprep.subr.bf16.mxu0 0
        %397 = vmatpush1.bf16.msra.mxu0 0
        %398 = vmatprep.subr.bf16.mxu0 0
        %399 = vmatpush1.bf16.msra.mxu0 0
        %400 = vmatprep.subr.bf16.mxu0 0
        %401 = vmatpush1.bf16.msra.mxu0 0
        %402 = vmatprep.subr.bf16.mxu0 0
        %403 = vmatpush1.bf16.msra.mxu0 0
        %404 = vmatprep.subr.bf16.mxu0 0
        %405 = vmatpush1.bf16.msra.mxu0 0
        %406 = vmatprep.subr.bf16.mxu0 0
        %407 = vmatpush1.bf16.msra.mxu0 0
        %408 = vmatprep.subr.bf16.mxu0 0
        %409 = vmatpush1.bf16.msra.mxu0 0
        %410 = vmatprep.subr.bf16.mxu0 0
        %411 = vmatpush1.bf16.msra.mxu0 0
        %412 = vmatprep.subr.bf16.mxu0 0
        %413 = vmatpush1.bf16.msra.mxu0 0
        %414 = vmatprep.subr.bf16.mxu0 0
        %415 = vmatpush1.bf16.msra.mxu0 0
        %416 = vmatprep.subr.bf16.mxu0 0
        %417 = vmatpush1.bf16.msra.mxu0 0
        %418 = vmatprep.subr.bf16.mxu0 0
        %419 = vmatpush1.bf16.msra.mxu0 0
        %420 = vmatprep.subr.bf16.mxu0 0
        %421 = vmatpush1.bf16.msra.mxu0 0
        %422 = vmatprep.mubr.bf16.mxu0 0
        %423 = vmatmul.mubr.bf16.gmra.mrb[0].mxu0 %v388
        %v424 = vpop.f32.mrb[0].mxu0
        %v425 = vadd.f32 %v373, %v424
        %v426 = vpop.f32.mrb[0].mxu0
        %v427 = vpop.f32.mrb[0].mxu0
        %v428 = vpop.f32.mrb[0].mxu0
        %429 = vdwg.mxu0
        %v430 = vpack.c.bf16 %v425, %v425
        %vm431 = vcmask 257024
        %432 = vst.msk [vmem:[%s321] sm:$0xf] %vm431, %v430
        %v434 = vunpack.c.l.b16 %v430
        %v435 = vpack.c.b16 %v434, %v434
        %436 = vrot.lane.b32.xlu0 %v435, 96
        %v437 = vpop.permute.xlu0 %436
        %439 = vst.msk [vmem:[%s325] sm:$0xf] %vm431, %v437
        %440 = vrot.lane.b32.xlu0 %v435, 64
        %v441 = vpop.permute.xlu0 %440
        %443 = vst.msk [vmem:[%s329] sm:$0xf] %vm431, %v441
        %p444 = scmp.lt.s32.totalorder %s23, 3
        %s445 = scalar_select %p444, %s23, 3
        %s446 = smul.addr %s445, 4
        %s447 = scalar_lea.vmem %s5, %s446
        %p448 = scmp.lt.s32.totalorder %s23, 3
        %s449 = scalar_select %p448, %s23, 3
        %s450 = smul.addr %s449, 4
        %s451 = scalar_lea.vmem %s6, %s450
        %p452 = scmp.lt.s32.totalorder %s23, 3
        %s453 = scalar_select %p452, %s23, 3
        %s454 = smul.addr %s453, 4
        %s455 = scalar_lea.vmem %s7, %s454
        // Predicated region
        $region49: #{transformer_encoder_block.3} parent=39 // pred_check
          %p456 = pneg %p151
        $region50: #{transformer_encoder_block.3} parent=39 // pred_check_branch
          %458 = sbr.rel (%p456) target = $region52
        $region51: #{transformer_encoder_block.3} parent=39 // pred_region
          _
        $region52: #{transformer_encoder_block.3} parent=39 // pred_fallthru
          _
        // Predicated region
        $region53: #{transformer_encoder_block.3} parent=39 // pred_check
          %p459 = pneg %p177
        $region54: #{transformer_encoder_block.3} parent=39 // pred_check_branch
          %461 = sbr.rel (%p459) target = $region56
        $region55: #{transformer_encoder_block.3} parent=39 // pred_region
          _
        $region56: #{transformer_encoder_block.3} parent=39 // pred_fallthru
          _
        // Predicated region
        $region57: #{transformer_encoder_block.3} parent=39 // pred_check
          %p462 = pneg %p203
        $region58: #{transformer_encoder_block.3} parent=39 // pred_check_branch
          %464 = sbr.rel (%p462) target = $region60
        $region59: #{transformer_encoder_block.3} parent=39 // pred_region
          _
        $region60: #{transformer_encoder_block.3} parent=39 // pred_fallthru
          _
      $region40: #{transformer_encoder_block.3} parent=5 // pred_fallthru
        _
      %p465 = scmp.le.s32.totalorder 2, %s18
      // Predicated region
      $region61: #{transformer_encoder_block.3} parent=5 // pred_check
        %p466 = pneg %p465
      $region62: #{transformer_encoder_block.3} parent=5 // pred_check_branch
        %468 = sbr.rel (%p466) target = $region64
      $region63: #{transformer_encoder_block.3} parent=5 // pred_region
        %s469 = ssub.s32 %s18, 2
        // Predicated region
        $region65: #{transformer_encoder_block.3} parent=63 // pred_check
          %p470 = pneg %p157
        $region66: #{transformer_encoder_block.3} parent=63 // pred_check_branch
          %472 = sbr.rel (%p470) target = $region68
        $region67: #{transformer_encoder_block.3} parent=63 // pred_region
          %p473 = scmp.lt.s32.totalorder %s24, 3
          %s474 = scalar_select %p473, %s24, 3
          %s475 = smul.addr %s474, 4
          %s476 = scalar_lea.vmem %s5, %s475
        $region68: #{transformer_encoder_block.3} parent=63 // pred_fallthru
          _
        // Predicated region
        $region69: #{transformer_encoder_block.3} parent=63 // pred_check
          %p477 = pneg %p183
        $region70: #{transformer_encoder_block.3} parent=63 // pred_check_branch
          %479 = sbr.rel (%p477) target = $region72
        $region71: #{transformer_encoder_block.3} parent=63 // pred_region
          %p480 = scmp.lt.s32.totalorder %s24, 3
          %s481 = scalar_select %p480, %s24, 3
          %s482 = smul.addr %s481, 4
          %s483 = scalar_lea.vmem %s6, %s482
        $region72: #{transformer_encoder_block.3} parent=63 // pred_fallthru
          _
        // Predicated region
        $region73: #{transformer_encoder_block.3} parent=63 // pred_check
          %p484 = pneg %p209
        $region74: #{transformer_encoder_block.3} parent=63 // pred_check_branch
          %486 = sbr.rel (%p484) target = $region76
        $region75: #{transformer_encoder_block.3} parent=63 // pred_region
          %p487 = scmp.lt.s32.totalorder %s24, 3
          %s488 = scalar_select %p487, %s24, 3
          %s489 = smul.addr %s488, 4
          %s490 = scalar_lea.vmem %s7, %s489
        $region76: #{transformer_encoder_block.3} parent=63 // pred_fallthru
          _
      $region64: #{transformer_encoder_block.3} parent=5 // pred_fallthru
        _
    $region6: #{transformer_encoder_block.3} parent=1 // loop_footer
      %s22 = sadd.s32 1, %s18
    $region7: #{transformer_encoder_block.3} parent=1 // loop_footer_branch
      %17 = sbr.rel target = $region3
    $region8: #{transformer_encoder_block.3} parent=1 // loop_exit
      _
    %491 = vsyncpa [#allocation3], 1
    %s492 = scalar_lea.sflag [#allocation3], 1
    %493 = vsyncpa %s492, 1
    %494 = vsyncpa [#allocation5], 1

// kernel: transformer_encoder_block.5
$region0: #{transformer_encoder_block.5}
  #allocation0 [shape = 'u32[]', space=smem, size = 0x4, offset = 0x4, fixed_abs, tag = 'smem constant byte address 0x4 - core index']
  #allocation1 [shape = 'u32[144,128]{1,0:T(1,128)}', space=vmem, size = 0x12000, scoped, tag = 'internal scratch']
  #allocation2 [shape = 'f32[8,32]{1,0:T(8,128)}', space=vmem, size = 0x1000, scoped, tag = 'scratch operand']
  #allocation3 [shape = 'bf16[8,32]{1,0:T(8,128)(2,1)}', space=vmem, size = 0x800, scoped, tag = 'scratch operand']
  #allocation4 [shape = 'f32[8,32]{1,0:T(8,128)}', space=vmem, size = 0x1000, scoped, tag = 'scratch operand']
  %s0 = inlined_call_operand.vmem [shape: bf16[32,32], index: 0, kind: input, shape index: {}]
  %s1 = inlined_call_operand.vmem [shape: bf16[32,32], index: 1, kind: input, shape index: {}]
  %s2 = inlined_call_operand.vmem [shape: f32[1,32], index: 2, kind: input, shape index: {}]
  %s3 = inlined_call_operand.vmem [shape: f32[32,32], index: 3, kind: input, shape index: {}]
  %s4 = inlined_call_operand.vmem [shape: f32[1,32], index: 4, kind: input, shape index: {}]
  %s5 = inlined_call_operand.vmem [shape: f32[1,32], index: 5, kind: input, shape index: {}]
  %s6 = inlined_call_operand.vmem [shape: bf16[32,256], index: 6, kind: input, shape index: {}]
  %s7 = inlined_call_operand.vmem [shape: f32[1,256], index: 7, kind: input, shape index: {}]
  %s8 = inlined_call_operand.vmem [shape: bf16[256,32], index: 8, kind: input, shape index: {}]
  %s9 = inlined_call_operand.vmem [shape: f32[1,32], index: 9, kind: input, shape index: {}]
  %s10 = inlined_call_operand.hbm [shape: f32[32,32], index: 10, kind: output, shape index: {}]
  %s11 = sld [smem:[#allocation0]]
  $region122: #{transformer_encoder_block.5} parent=0
    _
  %s13 = ssub.s32 1, %s11
  %s14 = scalar_select 0, %s13, %s11
  $region1: #{transformer_encoder_block.5} parent=0
    #allocation5 [shape = 'u8[16384]{0}', space=vmem, size = 0x4000, scoped, tag = 'input window, operand 6']
    #allocation6 [shape = 'u8[8192]{0}', space=vmem, size = 0x2000, scoped, tag = 'output window, operand 0']
    #allocation7 [shape = 's32[2]{0}', space=sflag, size = 0x8, scoped, tag = 'scoped memory for transformer_encoder_block.5']
    %15 = vsyncpa [#allocation7], 0
    %s16 = scalar_lea.sflag [#allocation7], 1
    %17 = vsyncpa %s16, 0
    loop: start=0, step=1, limit=10
    $region2: #{transformer_encoder_block.5} parent=1 // loop_pre_header
      _
    $region3: #{transformer_encoder_block.5} parent=1 // loop_header
      %s19 = sphi 0, %s23
      %p20 = scmp.ge.s32.totalorder %s19, 10
      %s26 = sphi 0, %s38
      %s27 = sphi 0, %s34
      %s28 = sphi 0, %s26
      %s29 = sphi 0, %s27
      %s30 = sphi 0, %s28
      %s31 = sphi 0, %s29
      %s41 = sphi 0, %s43
      %s44 = sphi 0, %s41
      %s45 = sphi 0, %s44
      %s61 = sphi 0, %s45
      %s65 = sphi 0, %s65
      %s67 = sphi 0, %s65
      %s68 = sphi 0, %s67
      %s82 = sphi 0, %s68
      %s86 = sphi 0, %s86
      %s88 = sphi 0, %s86
      %s89 = sphi 0, %s88
      %s103 = sphi 0, %s89
      %s109 = sphi 0, %s111
      %s112 = sphi 0, %s109
      %s113 = sphi 0, %s112
      %s129 = sphi 0, %s113
      %s133 = sphi 0, %s133
      %s135 = sphi 0, %s133
      %s136 = sphi 0, %s135
      %s150 = sphi 0, %s136
      %s154 = sphi 0, %s154
      %s156 = sphi 0, %s154
      %s157 = sphi 0, %s156
      %s171 = sphi 0, %s157
      %s177 = sphi 0, %s179
      %s180 = sphi 0, %s177
      %s181 = sphi 0, %s180
      %s197 = sphi 0, %s181
      %s203 = sphi 0, %s205
      %s206 = sphi 0, %s203
      %s207 = sphi 0, %s206
      %s223 = sphi 0, %s207
      %s229 = sphi 0, %s231
      %s232 = sphi 0, %s229
      %s233 = sphi 0, %s232
      %s249 = sphi 0, %s233
      %s253 = sphi 0, %s253
      %s255 = sphi 0, %s253
      %s256 = sphi 0, %s255
      %s270 = sphi 0, %s256
      %s276 = sphi 0, %s278
      %s279 = sphi 0, %s276
      %s280 = sphi 0, %s279
      %s296 = sphi 0, %s280
    $region4: #{transformer_encoder_block.5} parent=1 // loop_header_branch
      %22 = sbr.rel (%p20) target = $region8
    $region5: #{transformer_encoder_block.5} parent=1 // loop_body
      %s24 = ssub.s32 %s19, 1
      %s25 = ssub.s32 %s19, 2
      %s32 = sadd.s32 1, %s27
      %p33 = scmp.ge.s32.totalorder %s32, 2
      %s34 = scalar_select %p33, 0, %s32
      %s35 = sadd.s32 1, %s26
      %s36 = scalar_select %p33, %s35, %s26
      %p37 = scmp.ge.s32.totalorder %s36, 4
      %s38 = scalar_select %p37, 0, %s36
      %s39 = ssub.s32 %s26, %s38
      %p40 = scmp.eq.s32.totalorder %s39, 0
      %s42 = sadd.s32 %s41, 1
      %s43 = scalar_select %p40, %s41, %s42
      %p46 = pneg %p40
      %p47 = scmp.eq.s32.totalorder %s19, 7
      %p48 = por %p46, %p47
      %p49 = scmp.ne.s32.totalorder %s41, %s44
      %p50 = scmp.eq.s32.totalorder %s19, 0
      %p51 = por %p49, %p50
      %p52 = scmp.ne.s32.totalorder %s41, %s44
      %p53 = scmp.eq.s32.totalorder %s24, 7
      %p54 = por %p52, %p53
      %p55 = scmp.ne.s32.totalorder %s44, %s45
      %p56 = scmp.eq.s32.totalorder %s24, 0
      %p57 = por %p55, %p56
      %p58 = scmp.ne.s32.totalorder %s44, %s45
      %p59 = scmp.eq.s32.totalorder %s25, 7
      %p60 = por %p58, %p59
      %p62 = scmp.ne.s32.totalorder %s45, %s61
      %p63 = scmp.eq.s32.totalorder %s25, 0
      %p64 = por %p62, %p63
      %s66 = sadd.s32 %s65, 1
      %p69 = scmp.eq.s32.totalorder %s19, 7
      %p70 = scmp.ne.s32.totalorder %s65, %s67
      %p71 = scmp.eq.s32.totalorder %s19, 0
      %p72 = por %p70, %p71
      %p73 = scmp.ne.s32.totalorder %s65, %s67
      %p74 = scmp.eq.s32.totalorder %s24, 7
      %p75 = por %p73, %p74
      %p76 = scmp.ne.s32.totalorder %s67, %s68
      %p77 = scmp.eq.s32.totalorder %s24, 0
      %p78 = por %p76, %p77
      %p79 = scmp.ne.s32.totalorder %s67, %s68
      %p80 = scmp.eq.s32.totalorder %s25, 7
      %p81 = por %p79, %p80
      %p83 = scmp.ne.s32.totalorder %s68, %s82
      %p84 = scmp.eq.s32.totalorder %s25, 0
      %p85 = por %p83, %p84
      %s87 = sadd.s32 %s86, 1
      %p90 = scmp.eq.s32.totalorder %s19, 7
      %p91 = scmp.ne.s32.totalorder %s86, %s88
      %p92 = scmp.eq.s32.totalorder %s19, 0
      %p93 = por %p91, %p92
      %p94 = scmp.ne.s32.totalorder %s86, %s88
      %p95 = scmp.eq.s32.totalorder %s24, 7
      %p96 = por %p94, %p95
      %p97 = scmp.ne.s32.totalorder %s88, %s89
      %p98 = scmp.eq.s32.totalorder %s24, 0
      %p99 = por %p97, %p98
      %p100 = scmp.ne.s32.totalorder %s88, %s89
      %p101 = scmp.eq.s32.totalorder %s25, 7
      %p102 = por %p100, %p101
      %p104 = scmp.ne.s32.totalorder %s89, %s103
      %p105 = scmp.eq.s32.totalorder %s25, 0
      %p106 = por %p104, %p105
      %s107 = ssub.s32 %s26, %s38
      %p108 = scmp.eq.s32.totalorder %s107, 0
      %s110 = sadd.s32 %s109, 1
      %s111 = scalar_select %p108, %s109, %s110
      %p114 = pneg %p108
      %p115 = scmp.eq.s32.totalorder %s19, 7
      %p116 = por %p114, %p115
      %p117 = scmp.ne.s32.totalorder %s109, %s112
      %p118 = scmp.eq.s32.totalorder %s19, 0
      %p119 = por %p117, %p118
      %p120 = scmp.ne.s32.totalorder %s109, %s112
      %p121 = scmp.eq.s32.totalorder %s24, 7
      %p122 = por %p120, %p121
      %p123 = scmp.ne.s32.totalorder %s112, %s113
      %p124 = scmp.eq.s32.totalorder %s24, 0
      %p125 = por %p123, %p124
      %p126 = scmp.ne.s32.totalorder %s112, %s113
      %p127 = scmp.eq.s32.totalorder %s25, 7
      %p128 = por %p126, %p127
      %p130 = scmp.ne.s32.totalorder %s113, %s129
      %p131 = scmp.eq.s32.totalorder %s25, 0
      %p132 = por %p130, %p131
      %s134 = sadd.s32 %s133, 1
      %p137 = scmp.eq.s32.totalorder %s19, 7
      %p138 = scmp.ne.s32.totalorder %s133, %s135
      %p139 = scmp.eq.s32.totalorder %s19, 0
      %p140 = por %p138, %p139
      %p141 = scmp.ne.s32.totalorder %s133, %s135
      %p142 = scmp.eq.s32.totalorder %s24, 7
      %p143 = por %p141, %p142
      %p144 = scmp.ne.s32.totalorder %s135, %s136
      %p145 = scmp.eq.s32.totalorder %s24, 0
      %p146 = por %p144, %p145
      %p147 = scmp.ne.s32.totalorder %s135, %s136
      %p148 = scmp.eq.s32.totalorder %s25, 7
      %p149 = por %p147, %p148
      %p151 = scmp.ne.s32.totalorder %s136, %s150
      %p152 = scmp.eq.s32.totalorder %s25, 0
      %p153 = por %p151, %p152
      %s155 = sadd.s32 %s154, 1
      %p158 = scmp.eq.s32.totalorder %s19, 7
      %p159 = scmp.ne.s32.totalorder %s154, %s156
      %p160 = scmp.eq.s32.totalorder %s19, 0
      %p161 = por %p159, %p160
      %p162 = scmp.ne.s32.totalorder %s154, %s156
      %p163 = scmp.eq.s32.totalorder %s24, 7
      %p164 = por %p162, %p163
      %p165 = scmp.ne.s32.totalorder %s156, %s157
      %p166 = scmp.eq.s32.totalorder %s24, 0
      %p167 = por %p165, %p166
      %p168 = scmp.ne.s32.totalorder %s156, %s157
      %p169 = scmp.eq.s32.totalorder %s25, 7
      %p170 = por %p168, %p169
      %p172 = scmp.ne.s32.totalorder %s157, %s171
      %p173 = scmp.eq.s32.totalorder %s25, 0
      %p174 = por %p172, %p173
      %s175 = ssub.s32 %s27, %s34
      %p176 = scmp.eq.s32.totalorder %s175, 0
      %s178 = sadd.s32 %s177, 1
      %s179 = scalar_select %p176, %s177, %s178
      %p182 = pneg %p176
      %p183 = scmp.eq.s32.totalorder %s19, 7
      %p184 = por %p182, %p183
      %p185 = scmp.ne.s32.totalorder %s177, %s180
      %p186 = scmp.eq.s32.totalorder %s19, 0
      %p187 = por %p185, %p186
      %p188 = scmp.ne.s32.totalorder %s177, %s180
      %p189 = scmp.eq.s32.totalorder %s24, 7
      %p190 = por %p188, %p189
      %p191 = scmp.ne.s32.totalorder %s180, %s181
      %p192 = scmp.eq.s32.totalorder %s24, 0
      %p193 = por %p191, %p192
      %p194 = scmp.ne.s32.totalorder %s180, %s181
      %p195 = scmp.eq.s32.totalorder %s25, 7
      %p196 = por %p194, %p195
      %p198 = scmp.ne.s32.totalorder %s181, %s197
      %p199 = scmp.eq.s32.totalorder %s25, 0
      %p200 = por %p198, %p199
      %s201 = ssub.s32 %s27, %s34
      %p202 = scmp.eq.s32.totalorder %s201, 0
      %s204 = sadd.s32 %s203, 1
      %s205 = scalar_select %p202, %s203, %s204
      %p208 = pneg %p202
      %p209 = scmp.eq.s32.totalorder %s19, 7
      %p210 = por %p208, %p209
      %p211 = scmp.ne.s32.totalorder %s203, %s206
      %p212 = scmp.eq.s32.totalorder %s19, 0
      %p213 = por %p211, %p212
      %p214 = scmp.ne.s32.totalorder %s203, %s206
      %p215 = scmp.eq.s32.totalorder %s24, 7
      %p216 = por %p214, %p215
      %p217 = scmp.ne.s32.totalorder %s206, %s207
      %p218 = scmp.eq.s32.totalorder %s24, 0
      %p219 = por %p217, %p218
      %p220 = scmp.ne.s32.totalorder %s206, %s207
      %p221 = scmp.eq.s32.totalorder %s25, 7
      %p222 = por %p220, %p221
      %p224 = scmp.ne.s32.totalorder %s207, %s223
      %p225 = scmp.eq.s32.totalorder %s25, 0
      %p226 = por %p224, %p225
      %s227 = ssub.s32 %s27, %s34
      %p228 = scmp.eq.s32.totalorder %s227, 0
      %s230 = sadd.s32 %s229, 1
      %s231 = scalar_select %p228, %s229, %s230
      %p234 = pneg %p228
      %p235 = scmp.eq.s32.totalorder %s19, 7
      %p236 = por %p234, %p235
      %p237 = scmp.ne.s32.totalorder %s229, %s232
      %p238 = scmp.eq.s32.totalorder %s19, 0
      %p239 = por %p237, %p238
      %p240 = scmp.ne.s32.totalorder %s229, %s232
      %p241 = scmp.eq.s32.totalorder %s24, 7
      %p242 = por %p240, %p241
      %p243 = scmp.ne.s32.totalorder %s232, %s233
      %p244 = scmp.eq.s32.totalorder %s24, 0
      %p245 = por %p243, %p244
      %p246 = scmp.ne.s32.totalorder %s232, %s233
      %p247 = scmp.eq.s32.totalorder %s25, 7
      %p248 = por %p246, %p247
      %p250 = scmp.ne.s32.totalorder %s233, %s249
      %p251 = scmp.eq.s32.totalorder %s25, 0
      %p252 = por %p250, %p251
      %s254 = sadd.s32 %s253, 1
      %p257 = scmp.eq.s32.totalorder %s19, 7
      %p258 = scmp.ne.s32.totalorder %s253, %s255
      %p259 = scmp.eq.s32.totalorder %s19, 0
      %p260 = por %p258, %p259
      %p261 = scmp.ne.s32.totalorder %s253, %s255
      %p262 = scmp.eq.s32.totalorder %s24, 7
      %p263 = por %p261, %p262
      %p264 = scmp.ne.s32.totalorder %s255, %s256
      %p265 = scmp.eq.s32.totalorder %s24, 0
      %p266 = por %p264, %p265
      %p267 = scmp.ne.s32.totalorder %s255, %s256
      %p268 = scmp.eq.s32.totalorder %s25, 7
      %p269 = por %p267, %p268
      %p271 = scmp.ne.s32.totalorder %s256, %s270
      %p272 = scmp.eq.s32.totalorder %s25, 0
      %p273 = por %p271, %p272
      %s274 = ssub.s32 %s26, %s38
      %p275 = scmp.eq.s32.totalorder %s274, 0
      %s277 = sadd.s32 %s276, 1
      %s278 = scalar_select %p275, %s276, %s277
      %p281 = pneg %p275
      %p282 = scmp.eq.s32.totalorder %s19, 7
      %p283 = por %p281, %p282
      %p284 = scmp.ne.s32.totalorder %s276, %s279
      %p285 = scmp.eq.s32.totalorder %s19, 0
      %p286 = por %p284, %p285
      %p287 = scmp.ne.s32.totalorder %s276, %s279
      %p288 = scmp.eq.s32.totalorder %s24, 7
      %p289 = por %p287, %p288
      %p290 = scmp.ne.s32.totalorder %s279, %s280
      %p291 = scmp.eq.s32.totalorder %s24, 0
      %p292 = por %p290, %p291
      %p293 = scmp.ne.s32.totalorder %s279, %s280
      %p294 = scmp.eq.s32.totalorder %s25, 7
      %p295 = por %p293, %p294
      %p297 = scmp.ne.s32.totalorder %s280, %s296
      %p298 = scmp.eq.s32.totalorder %s25, 0
      %p299 = por %p297, %p298
      %p300 = scmp.le.s32.totalorder 1, %s19
      %p301 = scmp.lt.s32.totalorder %s19, 9
      %p302 = pnand %p300, %p301
      %p303 = pneg %p302
      // Predicated region
      $region9: #{transformer_encoder_block.5} parent=5 // pred_check
        _
      $region10: #{transformer_encoder_block.5} parent=5 // pred_check_branch
        %305 = sbr.rel (%p302) target = $region12
      $region11: #{transformer_encoder_block.5} parent=5 // pred_region
        %s306 = ssub.s32 %s19, 1
        // Predicated region
        $region13: #{transformer_encoder_block.5} parent=11 // pred_check
          %p307 = pneg %p78
        $region14: #{transformer_encoder_block.5} parent=11 // pred_check_branch
          %309 = sbr.rel (%p307) target = $region16
        $region15: #{transformer_encoder_block.5} parent=11 // pred_region
          _
        $region16: #{transformer_encoder_block.5} parent=11 // pred_fallthru
          _
        // Predicated region
        $region17: #{transformer_encoder_block.5} parent=11 // pred_check
          %p310 = pneg %p99
        $region18: #{transformer_encoder_block.5} parent=11 // pred_check_branch
          %312 = sbr.rel (%p310) target = $region20
        $region19: #{transformer_encoder_block.5} parent=11 // pred_region
          _
        $region20: #{transformer_encoder_block.5} parent=11 // pred_fallthru
          _
        // Predicated region
        $region21: #{transformer_encoder_block.5} parent=11 // pred_check
          %p313 = pneg %p146
        $region22: #{transformer_encoder_block.5} parent=11 // pred_check_branch
          %315 = sbr.rel (%p313) target = $region24
        $region23: #{transformer_encoder_block.5} parent=11 // pred_region
          _
        $region24: #{transformer_encoder_block.5} parent=11 // pred_fallthru
          _
        // Predicated region
        $region25: #{transformer_encoder_block.5} parent=11 // pred_check
          %p316 = pneg %p167
        $region26: #{transformer_encoder_block.5} parent=11 // pred_check_branch
          %318 = sbr.rel (%p316) target = $region28
        $region27: #{transformer_encoder_block.5} parent=11 // pred_region
          _
        $region28: #{transformer_encoder_block.5} parent=11 // pred_fallthru
          _
        // Predicated region
        $region29: #{transformer_encoder_block.5} parent=11 // pred_check
          %p319 = pneg %p266
        $region30: #{transformer_encoder_block.5} parent=11 // pred_check_branch
          %321 = sbr.rel (%p319) target = $region32
        $region31: #{transformer_encoder_block.5} parent=11 // pred_region
          _
        $region32: #{transformer_encoder_block.5} parent=11 // pred_fallthru
          _
      $region12: #{transformer_encoder_block.5} parent=5 // pred_fallthru
        _
      %p322 = scmp.lt.s32.totalorder %s19, 8
      // Predicated region
      $region33: #{transformer_encoder_block.5} parent=5 // pred_check
        %p323 = pneg %p322
      $region34: #{transformer_encoder_block.5} parent=5 // pred_check_branch
        %325 = sbr.rel (%p323) target = $region36
      $region35: #{transformer_encoder_block.5} parent=5 // pred_region
        // Predicated region
        $region37: #{transformer_encoder_block.5} parent=35 // pred_check
          %p326 = pneg %p51
        $region38: #{transformer_encoder_block.5} parent=35 // pred_check_branch
          %328 = sbr.rel (%p326) target = $region40
        $region39: #{transformer_encoder_block.5} parent=35 // pred_region
          %p329 = scmp.lt.s32.totalorder %s26, 3
          %s330 = scalar_select %p329, %s26, 3
          %s331 = smul.addr %s330, 4
          %s332 = scalar_lea.vmem %s0, %s331
        $region40: #{transformer_encoder_block.5} parent=35 // pred_fallthru
          _
        // Predicated region
        $region41: #{transformer_encoder_block.5} parent=35 // pred_check
          %p333 = pneg %p119
        $region42: #{transformer_encoder_block.5} parent=35 // pred_check_branch
          %335 = sbr.rel (%p333) target = $region44
        $region43: #{transformer_encoder_block.5} parent=35 // pred_region
          %p336 = scmp.lt.s32.totalorder %s26, 3
          %s337 = scalar_select %p336, %s26, 3
          %s338 = smul.addr %s337, 8
          %s339 = scalar_lea.vmem %s3, %s338
        $region44: #{transformer_encoder_block.5} parent=35 // pred_fallthru
          _
        // Predicated region
        $region45: #{transformer_encoder_block.5} parent=35 // pred_check
          %p340 = pneg %p187
        $region46: #{transformer_encoder_block.5} parent=35 // pred_check_branch
          %342 = sbr.rel (%p340) target = $region48
        $region47: #{transformer_encoder_block.5} parent=35 // pred_region
          %s343 = sand.u32 %s177, 1
          %s344 = sand.u32 %s177, 1
          %s345 = smul.addr %s344, 16
          %s346 = scalar_lea.vmem [#allocation5], %s345
          %s347 = smul.addr %s27, 4
          %s348 = scalar_lea.vmem %s6, %s347
          // Predicated region
          $region49: #{transformer_encoder_block.5} parent=47 // pred_check
            _
          $region50: #{transformer_encoder_block.5} parent=47 // pred_check_branch
            %350 = sbr.rel (0) target = $region52
          $region51: #{transformer_encoder_block.5} parent=47 // pred_region
            // Predicated region
            $region53: #{transformer_encoder_block.5} parent=51 // pred_check
              _
            $region54: #{transformer_encoder_block.5} parent=51 // pred_check_branch
              %352 = sbr.rel target = $region56
            $region55: #{transformer_encoder_block.5} parent=51 // pred_region
              // Predicated region
              $region68: #{transformer_encoder_block.5} parent=55 // pred_check
                _
              $region69: #{transformer_encoder_block.5} parent=55 // pred_check_branch
                %373 = sbr.rel (0) target = $region71
              $region70: #{transformer_encoder_block.5} parent=55 // pred_region
                loop: start=0, step=1, limit=1
                $region72: #{transformer_encoder_block.5} parent=70 // loop_pre_header
                  _
                $region73: #{transformer_encoder_block.5} parent=70 // loop_header
                  %s375 = sphi 0, %s379
                  %p376 = scmp.ge.s32.totalorder %s375, 1
                  %s380 = sphi %s348, %s348
                  %s381 = sphi %s346, %s346
                $region74: #{transformer_encoder_block.5} parent=70 // loop_header_branch
                  %378 = sbr.rel (%p376) target = $region78
                $region75: #{transformer_encoder_block.5} parent=70 // loop_body
                  _
                $region76: #{transformer_encoder_block.5} parent=70 // loop_footer
                  %s379 = sadd.s32 1, %s375
                $region77: #{transformer_encoder_block.5} parent=70 // loop_footer_branch
                  %374 = sbr.rel target = $region73
                $region78: #{transformer_encoder_block.5} parent=70 // loop_exit
                  _
                loop: start=0, step=1, limit=1
                $region79: #{transformer_encoder_block.5} parent=70 // loop_pre_header
                  _
                $region80: #{transformer_encoder_block.5} parent=70 // loop_header
                  %s384 = sphi 0, %s388
                  %p385 = scmp.ge.s32.totalorder %s384, 1
                  %s389 = sphi %s348, %s348
                  %s390 = sphi %s346, %s346
                $region81: #{transformer_encoder_block.5} parent=70 // loop_header_branch
                  %387 = sbr.rel (%p385) target = $region85
                $region82: #{transformer_encoder_block.5} parent=70 // loop_body
                  %v391 = vld [vmem:[%s389] sm:$0xf]
                  %392 = vst [vmem:[%s390] sm:$0xf] %v391
                  %v393 = vld [vmem:[%s389 + $0x8] sm:$0xf]
                  %394 = vst [vmem:[%s390 + $0x4] sm:$0xf] %v393
                  %v395 = vld [vmem:[%s389 + $0x10] sm:$0xf]
                  %396 = vst [vmem:[%s390 + $0x8] sm:$0xf] %v395
                  %v397 = vld [vmem:[%s389 + $0x18] sm:$0xf]
                  %398 = vst [vmem:[%s390 + $0xc] sm:$0xf] %v397
                $region83: #{transformer_encoder_block.5} parent=70 // loop_footer
                  %s388 = sadd.s32 1, %s384
                $region84: #{transformer_encoder_block.5} parent=70 // loop_footer_branch
                  %383 = sbr.rel target = $region80
                $region85: #{transformer_encoder_block.5} parent=70 // loop_exit
                  _
              $region71: #{transformer_encoder_block.5} parent=55 // pred_fallthru
                _
            $region56: #{transformer_encoder_block.5} parent=51 // pred_fallthru
              _
            // Predicated region
            $region57: #{transformer_encoder_block.5} parent=51 // pred_check
              _
            $region58: #{transformer_encoder_block.5} parent=51 // pred_check_branch
              %354 = sbr.rel (0) target = $region60
            $region59: #{transformer_encoder_block.5} parent=51 // pred_region
              loop: start=0, step=1, limit=1
              $region61: #{transformer_encoder_block.5} parent=59 // loop_pre_header
                _
              $region62: #{transformer_encoder_block.5} parent=59 // loop_header
                %s357 = sphi 0, %s361
                %p358 = scmp.ge.s32.totalorder %s357, 1
                %s362 = sphi %s348, %s348
                %s363 = sphi %s346, %s346
              $region63: #{transformer_encoder_block.5} parent=59 // loop_header_branch
                %360 = sbr.rel (%p358) target = $region67
              $region64: #{transformer_encoder_block.5} parent=59 // loop_body
                %v364 = vld [vmem:[%s362] sm:$0xf]
                %365 = vst [vmem:[%s363] sm:$0xf] %v364
                %v366 = vld [vmem:[%s362 + $0x8] sm:$0xf]
                %367 = vst [vmem:[%s363 + $0x4] sm:$0xf] %v366
                %v368 = vld [vmem:[%s362 + $0x10] sm:$0xf]
                %369 = vst [vmem:[%s363 + $0x8] sm:$0xf] %v368
                %v370 = vld [vmem:[%s362 + $0x18] sm:$0xf]
                %371 = vst [vmem:[%s363 + $0xc] sm:$0xf] %v370
              $region65: #{transformer_encoder_block.5} parent=59 // loop_footer
                %s361 = sadd.s32 1, %s357
              $region66: #{transformer_encoder_block.5} parent=59 // loop_footer_branch
                %356 = sbr.rel target = $region62
              $region67: #{transformer_encoder_block.5} parent=59 // loop_exit
                _
            $region60: #{transformer_encoder_block.5} parent=51 // pred_fallthru
              _
          $region52: #{transformer_encoder_block.5} parent=47 // pred_fallthru
            _
          %399 = vnop
        $region48: #{transformer_encoder_block.5} parent=35 // pred_fallthru
          _
        // Predicated region
        $region86: #{transformer_encoder_block.5} parent=35 // pred_check
          %p400 = pneg %p213
        $region87: #{transformer_encoder_block.5} parent=35 // pred_check_branch
          %402 = sbr.rel (%p400) target = $region89
        $region88: #{transformer_encoder_block.5} parent=35 // pred_region
          %p403 = scmp.lt.s32.totalorder %s27, 1
          %s404 = scalar_select %p403, %s27, 1
          %s405 = scalar_lea.vmem %s7, %s404
        $region89: #{transformer_encoder_block.5} parent=35 // pred_fallthru
          _
        // Predicated region
        $region90: #{transformer_encoder_block.5} parent=35 // pred_check
          %p406 = pneg %p239
        $region91: #{transformer_encoder_block.5} parent=35 // pred_check_branch
          %408 = sbr.rel (%p406) target = $region93
        $region92: #{transformer_encoder_block.5} parent=35 // pred_region
          %s409 = smul.u32 16, %s27
          %p410 = scmp.lt.s32.totalorder %s409, 31
          %s411 = scalar_select %p410, %s409, 31
          %s412 = smul.addr %s411, 4
          %s413 = scalar_lea.vmem %s8, %s412
          %s414 = smul.u32 16, %s27
        $region93: #{transformer_encoder_block.5} parent=35 // pred_fallthru
          _
      $region36: #{transformer_encoder_block.5} parent=5 // pred_fallthru
        _
      %p415 = scmp.le.s32.totalorder 1, %s19
      %p416 = scmp.lt.s32.totalorder %s19, 9
      %p417 = pnand %p415, %p416
      %p418 = pneg %p417
      // Predicated region
      $region94: #{transformer_encoder_block.5} parent=5 // pred_check
        _
      $region95: #{transformer_encoder_block.5} parent=5 // pred_check_branch
        %420 = sbr.rel (%p417) target = $region97
      $region96: #{transformer_encoder_block.5} parent=5 // pred_region
        %s421 = ssub.s32 %s19, 1
        %s422 = sand.u32 %s180, 1
        %s423 = sand.u32 %s180, 1
        %s424 = smul.addr %s423, 16
        %s425 = scalar_lea.vmem [#allocation5], %s424
        // Predicated region
        $region98: #{transformer_encoder_block.5} parent=96 // pred_check
          %p426 = pneg %p193
        $region99: #{transformer_encoder_block.5} parent=96 // pred_check_branch
          %428 = sbr.rel (%p426) target = $region101
        $region100: #{transformer_encoder_block.5} parent=96 // pred_region
          _
        $region101: #{transformer_encoder_block.5} parent=96 // pred_fallthru
          _
        %p429 = scmp.lt.s32.totalorder %s28, 3
        %s430 = scalar_select %p429, %s28, 3
        %s431 = smul.addr %s430, 4
        %s432 = scalar_lea.vmem %s0, %s431
        %p433 = pneg %p57
        %p434 = pneg %p54
        %p435 = pneg %p78
        %p436 = pneg %p75
        %p437 = pneg %p99
        %p438 = pneg %p96
        %p439 = scmp.lt.s32.totalorder %s28, 3
        %s440 = scalar_select %p439, %s28, 3
        %s441 = smul.addr %s440, 8
        %s442 = scalar_lea.vmem %s3, %s441
        %p443 = pneg %p125
        %p444 = pneg %p122
        %p445 = pneg %p146
        %p446 = pneg %p143
        %p447 = pneg %p167
        %p448 = pneg %p164
        %s449 = sand.u32 %s180, 1
        %s450 = sand.u32 %s180, 1
        %s451 = smul.addr %s450, 16
        %s452 = scalar_lea.vmem [#allocation5], %s451
        %p453 = pneg %p193
        %p454 = pneg %p190
        %p455 = scmp.lt.s32.totalorder %s29, 1
        %s456 = scalar_select %p455, %s29, 1
        %s457 = scalar_lea.vmem %s7, %s456
        %p458 = pneg %p219
        %p459 = pneg %p216
        %s460 = smul.u32 16, %s29
        %p461 = scmp.lt.s32.totalorder %s460, 31
        %s462 = scalar_select %p461, %s460, 31
        %s463 = smul.addr %s462, 4
        %s464 = scalar_lea.vmem %s8, %s463
        %p465 = pneg %p245
        %p466 = pneg %p242
        %p467 = pneg %p266
        %p468 = pneg %p263
        %p469 = pneg %p292
        %p470 = pneg %p289
        %s471 = sand.u32 %s279, 1
        %s472 = scalar_lea.sflag [#allocation7], %s471
        %s473 = sand.u32 %s279, 1
        %s474 = smul.addr %s473, 8
        %s475 = scalar_lea.vmem [#allocation6], %s474
        %p476 = scmp.lt.s32.totalorder %s28, 3
        %s477 = scalar_select %p476, %s28, 3
        %s478 = smul.addr %s477, 4
        %s479 = scalar_lea.vmem %s0, %s478
        %p480 = scmp.lt.s32.totalorder %s28, 3
        %s481 = scalar_select %p480, %s28, 3
        %s482 = smul.addr %s481, 8
        %s483 = scalar_lea.vmem %s3, %s482
        %p484 = scmp.lt.s32.totalorder %s29, 1
        %s485 = scalar_select %p484, %s29, 1
        %s486 = scalar_lea.vmem %s7, %s485
        %s487 = smul.u32 16, %s29
        %p488 = scmp.lt.s32.totalorder %s487, 31
        %s489 = scalar_select %p488, %s487, 31
        %s490 = smul.addr %s489, 4
        %s491 = scalar_lea.vmem %s8, %s490
        %s492 = smul.u32 16, %s29
        %p494 = scmp.eq.s32.totalorder %s29, 0
        // Predicated region
        $region102: #{transformer_encoder_block.5} parent=96 // pred_check
          %p495 = pneg %p494
        $region103: #{transformer_encoder_block.5} parent=96 // pred_check_branch
          %497 = sbr.rel (%p495) target = $region105
        $region104: #{transformer_encoder_block.5} parent=96 // pred_region
          %v498 = vld [vmem:[%s479] sm:$0xf]
          %v499 = vld [vmem:[%s1] sm:$0xf]
          %v500 = vld [vmem:[%s1 + $0x4] sm:$0xf]
          %v501 = vld [vmem:[%s1 + $0x8] sm:$0xf]
          %v502 = vld [vmem:[%s1 + $0xc] sm:$0xf]
          %v503 = vld [vmem:[%s2] sm:$0x1]
          %v505 = vlaneseq
          %v506 = vshrl.u32 %v505, 7
          %v507 = vsub.s32 0, %v506
          %v508 = vrot.slane %v503, %v507
          %v514 = vunpack.c.l.b16 %v499
          %v515 = vunpack.c.l.b16 %v500
          %v516 = vunpack.c.l.b16 %v501
          %v517 = vunpack.c.l.b16 %v502
          %v518 = vpack.c.b16 %v515, %v514
          %v519 = vpack.c.b16 %v517, %v516
          %vm522 = vcmask 261120
          %v524 = vsel %vm522, %v498, 0
          %526 = vmatprep.subr.bf16.mxu0 0
          %527 = vmatpush1.bf16.msra.mxu0 %v518
          %528 = vmatprep.subr.bf16.mxu0 0
          %529 = vmatpush1.bf16.msra.mxu0 %v519
          %530 = vmatprep.subr.bf16.mxu0 0
          %531 = vmatpush1.bf16.msra.mxu0 0
          %532 = vmatprep.subr.bf16.mxu0 0
          %533 = vmatpush1.bf16.msra.mxu0 0
          %534 = vmatprep.subr.bf16.mxu0 0
          %535 = vmatpush1.bf16.msra.mxu0 0
          %536 = vmatprep.subr.bf16.mxu0 0
          %537 = vmatpush1.bf16.msra.mxu0 0
          %538 = vmatprep.subr.bf16.mxu0 0
          %539 = vmatpush1.bf16.msra.mxu0 0
          %540 = vmatprep.subr.bf16.mxu0 0
          %541 = vmatpush1.bf16.msra.mxu0 0
          %542 = vmatprep.subr.bf16.mxu0 0
          %543 = vmatpush1.bf16.msra.mxu0 0
          %544 = vmatprep.subr.bf16.mxu0 0
          %545 = vmatpush1.bf16.msra.mxu0 0
          %546 = vmatprep.subr.bf16.mxu0 0
          %547 = vmatpush1.bf16.msra.mxu0 0
          %548 = vmatprep.subr.bf16.mxu0 0
          %549 = vmatpush1.bf16.msra.mxu0 0
          %550 = vmatprep.subr.bf16.mxu0 0
          %551 = vmatpush1.bf16.msra.mxu0 0
          %552 = vmatprep.subr.bf16.mxu0 0
          %553 = vmatpush1.bf16.msra.mxu0 0
          %554 = vmatprep.subr.bf16.mxu0 0
          %555 = vmatpush1.bf16.msra.mxu0 0
          %556 = vmatprep.subr.bf16.mxu0 0
          %557 = vmatpush1.bf16.msra.mxu0 0
          %558 = vmatprep.mubr.bf16.mxu0 0
          %559 = vmatmul.mubr.bf16.gmra.mrb[0].mxu0 %v524
          %v560 = vpop.f32.mrb[0].mxu0
          %v561 = vadd.f32 %v508, %v560
          %v562 = vpop.f32.mrb[0].mxu0
          %v563 = vpop.f32.mrb[0].mxu0
          %v564 = vpop.f32.mrb[0].mxu0
          %565 = vdwg.mxu0
          %v566 = vld [vmem:[%s483] sm:$0xff]
          %v567 = vadd.f32 %v566, %v561
          %568 = vst.msk [vmem:[#allocation2] sm:$0xff] %vm522, %v567
          %v569 = vsel %vm522, %v567, 0.0
          %570 = vadd.xlane.f32.xlu0 %v569
          %v571 = vpop.xlane.xlu0 %570
          %v572 = vrcp.pop 32.0
          %v573 = vmul.f32 %v571, %v572
          %v574 = vsub.f32 %v567, %v573
          %v575 = vmul.f32 %v574, %v574
          %v576 = vsel %vm522, %v575, 0.0
          %577 = vadd.xlane.f32.xlu0 %v576
          %v578 = vpop.xlane.xlu0 %577
          %v579 = vmul.f32 %v578, %v572
          %v580 = vadd.f32 %v579, 1e-05
          %v581 = vrsqrt.pop %v580
          %v582 = vmul.f32 %v574, %v581
          %v583 = vld [vmem:[%s4] sm:$0x1]
          %v585 = vlaneseq
          %v586 = vshrl.u32 %v585, 7
          %v587 = vsub.s32 0, %v586
          %v588 = vrot.slane %v583, %v587
          %v590 = vmul.f32 %v582, %v588
          %v591 = vld [vmem:[%s5] sm:$0x1]
          %v593 = vlaneseq
          %v594 = vshrl.u32 %v593, 7
          %v595 = vsub.s32 0, %v594
          %v596 = vrot.slane %v591, %v595
          %v598 = vadd.f32 %v590, %v596
          %v599 = vpack.c.bf16 %v598, %v598
          %vm600 = vcmask 257024
          %601 = vst.msk [vmem:[#allocation3] sm:$0xf] %vm600, %v599
          %602 = vst.msk [vmem:[#allocation4] sm:$0xff] %vm522, 0.0
        $region105: #{transformer_encoder_block.5} parent=96 // pred_fallthru
          _
        %v603 = vld [vmem:[#allocation3] sm:$0xf]
        %v604 = vld [vmem:[%s425] sm:$0xf]
        %v605 = vld [vmem:[%s425 + $0x4] sm:$0xf]
        %v606 = vld [vmem:[%s425 + $0x8] sm:$0xf]
        %v607 = vld [vmem:[%s425 + $0xc] sm:$0xf]
        %v608 = vld [vmem:[%s486] sm:$0x1]
        %v610 = vlaneseq
        %v611 = vshrl.u32 %v610, 7
        %v612 = vsub.s32 0, %v611
        %v613 = vrot.slane %v608, %v612
        %v619 = vunpack.c.l.b16 %v604
        %v620 = vunpack.c.l.b16 %v605
        %v621 = vunpack.c.l.b16 %v606
        %v622 = vunpack.c.l.b16 %v607
        %v623 = vpack.c.b16 %v620, %v619
        %v624 = vpack.c.b16 %v622, %v621
        %vm627 = vcmask 261120
        %v629 = vsel %vm627, %v603, 0
        %631 = vmatprep.subr.bf16.mxu0 0
        %632 = vmatpush1.bf16.msra.mxu0 %v623
        %633 = vmatprep.subr.bf16.mxu0 0
        %634 = vmatpush1.bf16.msra.mxu0 %v624
        %635 = vmatprep.subr.bf16.mxu0 0
        %636 = vmatpush1.bf16.msra.mxu0 0
        %637 = vmatprep.subr.bf16.mxu0 0
        %638 = vmatpush1.bf16.msra.mxu0 0
        %639 = vmatprep.subr.bf16.mxu0 0
        %640 = vmatpush1.bf16.msra.mxu0 0
        %641 = vmatprep.subr.bf16.mxu0 0
        %642 = vmatpush1.bf16.msra.mxu0 0
        %643 = vmatprep.subr.bf16.mxu0 0
        %644 = vmatpush1.bf16.msra.mxu0 0
        %645 = vmatprep.subr.bf16.mxu0 0
        %646 = vmatpush1.bf16.msra.mxu0 0
        %647 = vmatprep.subr.bf16.mxu0 0
        %648 = vmatpush1.bf16.msra.mxu0 0
        %649 = vmatprep.subr.bf16.mxu0 0
        %650 = vmatpush1.bf16.msra.mxu0 0
        %651 = vmatprep.subr.bf16.mxu0 0
        %652 = vmatpush1.bf16.msra.mxu0 0
        %653 = vmatprep.subr.bf16.mxu0 0
        %654 = vmatpush1.bf16.msra.mxu0 0
        %655 = vmatprep.subr.bf16.mxu0 0
        %656 = vmatpush1.bf16.msra.mxu0 0
        %657 = vmatprep.subr.bf16.mxu0 0
        %658 = vmatpush1.bf16.msra.mxu0 0
        %659 = vmatprep.subr.bf16.mxu0 0
        %660 = vmatpush1.bf16.msra.mxu0 0
        %661 = vmatprep.subr.bf16.mxu0 0
        %662 = vmatpush1.bf16.msra.mxu0 0
        %663 = vmatprep.mubr.bf16.mxu0 0
        %664 = vmatmul.mubr.bf16.gmra.mrb[0].mxu0 %v629
        %v665 = vpop.f32.mrb[0].mxu0
        %v666 = vadd.f32 %v613, %v665
        %v667 = vpop.f32.mrb[0].mxu0
        %v668 = vpop.f32.mrb[0].mxu0
        %v669 = vpop.f32.mrb[0].mxu0
        %670 = vdwg.mxu0
        %v671 = vmax.f32 %v666, 0.0
        %v672 = vld [vmem:[#allocation4] sm:$0xff]
        %v673 = vpack.c.bf16 %v671, %v671
        %v674 = vld [vmem:[%s491] sm:$0xf]
        %v675 = vld [vmem:[%s491 + $0x4] sm:$0xf]
        %v676 = vld [vmem:[%s491 + $0x8] sm:$0xf]
        %v677 = vld [vmem:[%s491 + $0xc] sm:$0xf]
        %v678 = vld [vmem:[%s491 + $0x10] sm:$0xf]
        %v679 = vld [vmem:[%s491 + $0x14] sm:$0xf]
        %v680 = vld [vmem:[%s491 + $0x18] sm:$0xf]
        %v681 = vld [vmem:[%s491 + $0x1c] sm:$0xf]
        %v682 = vld [vmem:[%s491 + $0x20] sm:$0xf]
        %v683 = vld [vmem:[%s491 + $0x24] sm:$0xf]
        %v684 = vld [vmem:[%s491 + $0x28] sm:$0xf]
        %v685 = vld [vmem:[%s491 + $0x2c] sm:$0xf]
        %v686 = vld [vmem:[%s491 + $0x30] sm:$0xf]
        %v687 = vld [vmem:[%s491 + $0x34] sm:$0xf]
        %v688 = vld [vmem:[%s491 + $0x38] sm:$0xf]
        %v689 = vld [vmem:[%s491 + $0x3c] sm:$0xf]
        %v706 = vunpack.c.l.b16 %v674
        %v707 = vunpack.c.l.b16 %v675
        %v708 = vunpack.c.l.b16 %v676
        %v709 = vunpack.c.l.b16 %v677
        %v710 = vunpack.c.l.b16 %v678
        %v711 = vunpack.c.l.b16 %v679
        %v712 = vunpack.c.l.b16 %v680
        %v713 = vunpack.c.l.b16 %v681
        %v714 = vunpack.c.l.b16 %v682
        %v715 = vunpack.c.l.b16 %v683
        %v716 = vunpack.c.l.b16 %v684
        %v717 = vunpack.c.l.b16 %v685
        %v718 = vunpack.c.l.b16 %v686
        %v719 = vunpack.c.l.b16 %v687
        %v720 = vunpack.c.l.b16 %v688
        %v721 = vunpack.c.l.b16 %v689
        %v722 = vpack.c.b16 %v707, %v706
        %v723 = vpack.c.b16 %v709, %v708
        %v724 = vpack.c.b16 %v711, %v710
        %v725 = vpack.c.b16 %v713, %v712
        %v726 = vpack.c.b16 %v715, %v714
        %v727 = vpack.c.b16 %v717, %v716
        %v728 = vpack.c.b16 %v719, %v718
        %v729 = vpack.c.b16 %v721, %v720
        %738 = vmatprep.subr.bf16.mxu0 0
        %739 = vmatpush1.bf16.msra.mxu0 %v722
        %740 = vmatprep.subr.bf16.mxu0 0
        %741 = vmatpush1.bf16.msra.mxu0 %v723
        %742 = vmatprep.subr.bf16.mxu0 0
        %743 = vmatpush1.bf16.msra.mxu0 %v724
        %744 = vmatprep.subr.bf16.mxu0 0
        %745 = vmatpush1.bf16.msra.mxu0 %v725
        %746 = vmatprep.subr.bf16.mxu0 0
        %747 = vmatpush1.bf16.msra.mxu0 %v726
        %748 = vmatprep.subr.bf16.mxu0 0
        %749 = vmatpush1.bf16.msra.mxu0 %v727
        %750 = vmatprep.subr.bf16.mxu0 0
        %751 = vmatpush1.bf16.msra.mxu0 %v728
        %752 = vmatprep.subr.bf16.mxu0 0
        %753 = vmatpush1.bf16.msra.mxu0 %v729
        %754 = vmatprep.subr.bf16.mxu0 0
        %755 = vmatpush1.bf16.msra.mxu0 0
        %756 = vmatprep.subr.bf16.mxu0 0
        %757 = vmatpush1.bf16.msra.mxu0 0
        %758 = vmatprep.subr.bf16.mxu0 0
        %759 = vmatpush1.bf16.msra.mxu0 0
        %760 = vmatprep.subr.bf16.mxu0 0
        %761 = vmatpush1.bf16.msra.mxu0 0
        %762 = vmatprep.subr.bf16.mxu0 0
        %763 = vmatpush1.bf16.msra.mxu0 0
        %764 = vmatprep.subr.bf16.mxu0 0
        %765 = vmatpush1.bf16.msra.mxu0 0
        %766 = vmatprep.subr.bf16.mxu0 0
        %767 = vmatpush1.bf16.msra.mxu0 0
        %768 = vmatprep.subr.bf16.mxu0 0
        %769 = vmatpush1.bf16.msra.mxu0 0
        %770 = vmatprep.mubr.bf16.mxu0 0
        %771 = vmatmul.mubr.bf16.gmra.mrb[0].mxu0 %v673
        %v772 = vpop.f32.mrb[0].mxu0
        %v773 = vadd.f32 0.0, %v772
        %v774 = vpop.f32.mrb[0].mxu0
        %v775 = vpop.f32.mrb[0].mxu0
        %v776 = vpop.f32.mrb[0].mxu0
        %777 = vdwg.mxu0
        %v778 = vadd.f32 %v672, %v773
        %779 = vst.msk [vmem:[#allocation4] sm:$0xff] %vm627, %v778
        %p780 = scmp.eq.s32.totalorder %s29, 1
        // Predicated region
        $region106: #{transformer_encoder_block.5} parent=96 // pred_check
          %p781 = pneg %p780
        $region107: #{transformer_encoder_block.5} parent=96 // pred_check_branch
          %783 = sbr.rel (%p781) target = $region109
        $region108: #{transformer_encoder_block.5} parent=96 // pred_region
          %v784 = vld [vmem:[#allocation2] sm:$0xff]
          %v785 = vld [vmem:[#allocation4] sm:$0xff]
          %v786 = vadd.f32 %v784, %v785
          %v787 = vld [vmem:[%s9] sm:$0x1]
          %v789 = vlaneseq
          %v790 = vshrl.u32 %v789, 7
          %v791 = vsub.s32 0, %v790
          %v792 = vrot.slane %v787, %v791
          %v794 = vadd.f32 %v786, %v792
          %795 = vst.msk [vmem:[%s475] sm:$0xff] %vm627, %v794
        $region109: #{transformer_encoder_block.5} parent=96 // pred_fallthru
          _
        %s796 = sand.u32 %s279, 1
        %s797 = scalar_lea.sflag [#allocation7], %s796
        %s798 = sand.u32 %s279, 1
        %s799 = smul.addr %s798, 8
        %s800 = scalar_lea.vmem [#allocation6], %s799
        // Predicated region
        $region110: #{transformer_encoder_block.5} parent=96 // pred_check
          %p801 = pneg %p289
        $region111: #{transformer_encoder_block.5} parent=96 // pred_check_branch
          %803 = sbr.rel (%p801) target = $region113
        $region112: #{transformer_encoder_block.5} parent=96 // pred_region
          %s805 = ssub.s32 128, 128
          %806 = vsyncadd %s797, %s805
          %s807 = smul.addr %s28, 128
          %s808 = scalar_lea.hbm %s10, %s807
          %s810 = sshll.u32 %s800, 4
          %s811 = int_to_ptr.vmem [resolvable:$true] %s810
          %813 = dma.vmem_to_hbm [thread:$0]  %s811, 128, %s808, %s797
        $region113: #{transformer_encoder_block.5} parent=96 // pred_fallthru
          _
      $region97: #{transformer_encoder_block.5} parent=5 // pred_fallthru
        _
      %p814 = scmp.le.s32.totalorder 2, %s19
      // Predicated region
      $region114: #{transformer_encoder_block.5} parent=5 // pred_check
        %p815 = pneg %p814
      $region115: #{transformer_encoder_block.5} parent=5 // pred_check_branch
        %817 = sbr.rel (%p815) target = $region117
      $region116: #{transformer_encoder_block.5} parent=5 // pred_region
        %s818 = ssub.s32 %s19, 2
        // Predicated region
        $region118: #{transformer_encoder_block.5} parent=116 // pred_check
          %p819 = pneg %p295
        $region119: #{transformer_encoder_block.5} parent=116 // pred_check_branch
          %821 = sbr.rel (%p819) target = $region121
        $region120: #{transformer_encoder_block.5} parent=116 // pred_region
          %s822 = sand.u32 %s280, 1
          %s823 = scalar_lea.sflag [#allocation7], %s822
          %s824 = sand.u32 %s280, 1
          %s825 = smul.addr %s824, 8
          %s826 = scalar_lea.vmem [#allocation6], %s825
          %827 = dma.done %s823, 128
        $region121: #{transformer_encoder_block.5} parent=116 // pred_fallthru
          _
      $region117: #{transformer_encoder_block.5} parent=5 // pred_fallthru
        _
    $region6: #{transformer_encoder_block.5} parent=1 // loop_footer
      %s23 = sadd.s32 1, %s19
    $region7: #{transformer_encoder_block.5} parent=1 // loop_footer_branch
      %18 = sbr.rel target = $region3
    $region8: #{transformer_encoder_block.5} parent=1 // loop_exit
      _
    %828 = vsyncpa [#allocation7], 1
    %s829 = scalar_lea.sflag [#allocation7], 1
    %830 = vsyncpa %s829, 1

</llo_original>
